<compile_context>
chip_gen: v6e
topology: v6e:2x2x1
jax: 0.10.0
libtpu: 0.0.40
codegen_flags: <defaults>
</compile_context>

<pallas_src>
import functools

import jax
import jax.numpy as jnp
from jax.experimental import pallas as pl
from jax.experimental.pallas import tpu as pltpu

D_IN = 768                            # Conv1d in_channels, fixed by the module
CHANNEL = 32                          # module default
KERNEL_SIZES = (1, 2, 4, 8)
KMAX = max(KERNEL_SIZES)
N_PAIRS = KMAX // 2                   # taps are packed two-per-matmul (N=256)
C_TOT = CHANNEL * len(KERNEL_SIZES)   # 128 -> lane-dense output
BN_EPS = 1e-5

_TARGET_ROWS = 2048                   # packed matmul M rows per grid step


# ------------------------------- kernel --------------------------------------

def _fused_fastcnn_kernel(x_ref, w_ref, shift_ref, mask_ref, o_ref, *,
                          total_rows, ragged):
    """All four FastCNN branches for one block of batch rows.

    x_ref:     (block_B, L, 768)  f32/bf16  channels-last input block
    w_ref:     (4, 768, 256)      bf16      tap-PAIR weights: [..., :128] is
                                            tap 2p, [..., 128:] is tap 2p+1;
                                            BN scale folded; taps >= k zeroed
    shift_ref: (1, 128)           f32       folded conv bias + BN shift
    mask_ref:  (L, 128)           f32       1.0 where t is a valid conv output
                                            for that channel's branch
    o_ref:     (1, block_B, 128)  f32       per-block output (max over time)
    """
    bb, seq, d = x_ref.shape
    n = bb * seq
    c_tot = o_ref.shape[-1]
    n_pairs = w_ref.shape[0]

    # In-kernel bf16 cast (no wrapper-side HBM pass over the activations).
    x2 = x_ref[...].reshape(n, d).astype(jnp.bfloat16)

    if ragged:
        # The last block extends past the real batch; the OOB rows of the VMEM
        # buffer are unspecified.  Zero them BEFORE the matmul so garbage/NaN
        # cannot roll into the last real row's accumulation.
        row = jax.lax.broadcasted_iota(jnp.int32, (n, 1), 0)
        start = pl.program_id(0) * n
        x2 = jnp.where(start + row < total_rows, x2, jnp.bfloat16(0))

    # Tap-pair matmuls: one (n,768)x(768,256) bf16 MXU matmul per pair keeps
    # the 256-wide MXU of v6e/v7x full.  The two 128-lane halves (taps 2p and
    # 2p+1) are time-shifted on the NARROW f32 product with pltpu.roll (XLU
    # slot) and accumulated; wrapped rows only land on masked positions.
    acc = None
    for p in range(n_pairs):                       # static unroll, 4 pairs
        z = jnp.dot(x2, w_ref[p], preferred_element_type=jnp.float32)
        lo = z[:, :c_tot]                          # tap 2p
        hi = z[:, c_tot:]                          # tap 2p + 1
        if 2 * p:
            lo = pltpu.roll(lo, shift=n - 2 * p, axis=0)
        hi = pltpu.roll(hi, shift=n - (2 * p + 1), axis=0)
        contrib = lo + hi
        acc = contrib if acc is None else acc + contrib
    # TODO(synk): a further ~2x MXU compaction (packing the 480 nonzero
    # (tap,channel) columns into 2 dense 256-wide slabs) needs per-32-lane
    # relocation rolls/selects; after the changes above the kernel sits at or
    # near the HBM roofline on v6e/v7x, so that mainly pays on v5e.

    y = jnp.maximum(acc + shift_ref[...], 0.0)     # folded bias/BN + ReLU
    # TODO(synk): nn.Dropout is identity in eval mode; training-mode random
    # masking is intentionally not emulated here.
    y = y.reshape(bb, seq, c_tot)
    # Kill time positions that are not valid conv outputs for the channel's
    # branch (t > L - k), including roll wrap-around.  Use a select (not a
    # multiply) so non-finite garbage can never leak through a zero.
    y = jnp.where(mask_ref[...][None] > 0.5, y, 0.0)
    o_ref[0] = jnp.max(y, axis=1)                  # AdaptiveMaxPool1d(1)+squeeze


# ------------------------------- wrapper --------------------------------------

def _time_mask(seq_len):
    """(L, 128) f32 mask: 1.0 where t <= L - k for the channel's branch."""
    cols = []
    t = jnp.arange(seq_len)
    for k in KERNEL_SIZES:
        valid = (t < (seq_len - k + 1)).astype(jnp.float32)          # (L,)
        cols.append(jnp.tile(valid[:, None], (1, CHANNEL)))
    return jnp.concatenate(cols, axis=1)                             # (L, 128)


def _vmem_capacity_bytes():
    """Per-core VMEM of the local chip; conservative fallback if unqueryable."""
    try:
        return int(pltpu.get_tpu_info().vmem_capacity_bytes)
    except Exception:
        return 64 * 1024 * 1024        # v7x-sized (smallest current part)


def _choose_block_b(batch, seq_len, vmem_cap):
    """Batch rows per grid step.

    Targets n = block_b * L ~= _TARGET_ROWS so the ~0.35us/step pipeline
    overhead and MXU fill/drain amortize, capped by a per-generation VMEM
    budget (f32 input block double-buffered, plus in-kernel bf16 copy, the
    (n,256) tap-pair product and the (n,128) accumulators).  block_b stays a
    multiple of 8 when possible (dense stores, free reshape collapse).
    """
    per_row = seq_len * (D_IN * 4 * 2        # f32 input block, double-buffered
                         + D_IN * 2          # in-kernel bf16 copy of the block
                         + 2 * C_TOT * 4     # (n, 256) tap-pair product
                         + 2 * C_TOT * 4)    # accumulator + masked copy
    budget = max(int(vmem_cap * 0.6) - (6 << 20), 4 << 20)   # weights/out/slack
    bb = max(1, min(max(_TARGET_ROWS // max(seq_len, 1), 1), budget // per_row))
    bb = min(bb, batch)
    if bb >= 8:
        bb -= bb % 8                         # multiple of 8: dense vst layout
    # Rebalance so the last block is not mostly padding.
    grid_b = pl.cdiv(batch, bb)
    bb2 = pl.cdiv(batch, grid_b)
    if bb2 >= 8:
        bb2 += (-bb2) % 8
    bb = min(bb, max(bb2, 1))
    # TODO(synk): on v7x (2 TensorCores) it can pay to force >= 2 grid steps
    # when batch*L is in [2048, 4096); needs a reliable core-count query.
    return max(1, bb)


def fast_cnn_forward(x, w_pairs, shift, block_b=None):
    """x: (B, L, 768) f32/bf16; w_pairs: (4, 768, 256) bf16; shift: (1, 128) f32.
    Returns (B, 128) f32, channels ordered by KERNEL_SIZES (k=1,2,4,8)."""
    batch, seq_len, d = x.shape
    if d != D_IN:
        raise ValueError(f"expected feature dim {D_IN}, got {d}")
    if seq_len < KMAX:
        raise ValueError(f"sequence length {seq_len} < largest kernel {KMAX}")
    if w_pairs.shape != (N_PAIRS, D_IN, 2 * C_TOT):
        raise ValueError(f"bad weight shape {w_pairs.shape}")

    vmem_cap = _vmem_capacity_bytes()
    if block_b is None:
        block_b = _choose_block_b(batch, seq_len, vmem_cap)
    block_b = max(1, min(block_b, batch))
    grid_b = pl.cdiv(batch, block_b)

    mask = _time_mask(seq_len)

    kernel = functools.partial(
        _fused_fastcnn_kernel,
        total_rows=batch * seq_len,
        ragged=(batch % block_b != 0))

    # Scoped-VMEM limit follows the estimated per-step footprint (keeps small
    # problems at the default, lets long-L / big-block cases grow on the
    # 128 MiB v5e/v6e parts without overshooting v7x's 64 MiB).
    n_rows = block_b * seq_len
    est_vmem = (2 * n_rows * D_IN * x.dtype.itemsize        # input double-buffer
                + n_rows * (D_IN * 2 + 4 * C_TOT * 4)       # bf16 copy + temps
                + 2 * N_PAIRS * D_IN * 2 * C_TOT * 2        # bf16 weight dbuf
                + (2 << 20))                                 # shift/mask/out/slack
    vmem_limit = max(32 << 20, min(int(est_vmem * 1.3), 96 << 20))

    out = pl.pallas_call(
        kernel,
        out_shape=jax.ShapeDtypeStruct((grid_b, block_b, C_TOT), jnp.float32),
        grid_spec=pltpu.PrefetchScalarGridSpec(
            num_scalar_prefetch=0,
            grid=(grid_b,),
            in_specs=[
                pl.BlockSpec((block_b, seq_len, D_IN), lambda i: (i, 0, 0)),
                pl.BlockSpec((N_PAIRS, D_IN, 2 * C_TOT), lambda i: (0, 0, 0)),
                pl.BlockSpec((1, C_TOT), lambda i: (0, 0)),
                pl.BlockSpec((seq_len, C_TOT), lambda i: (0, 0)),
            ],
            out_specs=pl.BlockSpec((1, block_b, C_TOT), lambda i: (i, 0, 0)),
        ),
        compiler_params=pltpu.CompilerParams(
            dimension_semantics=("parallel",),
            vmem_limit_bytes=vmem_limit),
    )(x, w_pairs, shift, mask)

    return out.reshape(grid_b * block_b, C_TOT)[:batch]


# ----------------------------- parameters ------------------------------------

def init_torch_like_params(key, channel=CHANNEL):
    """Synthetic Conv1d + BatchNorm1d parameters in PyTorch layout."""
    params = {}
    for k in KERNEL_SIZES:
        key, kw, kb, kg, kbe, km, kv = jax.random.split(key, 7)
        params[k] = dict(
            w=0.02 * jax.random.normal(kw, (channel, D_IN, k), jnp.float32),
            b=0.01 * jax.random.normal(kb, (channel,), jnp.float32),
            gamma=1.0 + 0.1 * jax.random.normal(kg, (channel,), jnp.float32),
            beta=0.05 * jax.random.normal(kbe, (channel,), jnp.float32),
            mean=0.1 * jax.random.normal(km, (channel,), jnp.float32),
            var=jnp.abs(1.0 + 0.1 * jax.random.normal(kv, (channel,), jnp.float32)),
        )
    return params


def fold_params(params, channel=CHANNEL):
    """Fold conv bias + BatchNorm (eval) into tap-PAIR weights + one shift.

    Returns w_pairs (4, 768, 256) bf16 with [..., :128] = tap 2p and
    [..., 128:] = tap 2p+1 (taps >= k zero-padded per branch, BN scale folded)
    and shift (1, 128) f32 (folded conv bias + BN shift)."""
    w_tap = jnp.zeros((KMAX, D_IN, C_TOT), jnp.float32)
    shift = jnp.zeros((C_TOT,), jnp.float32)
    for bi, k in enumerate(KERNEL_SIZES):
        p = params[k]
        scale = p['gamma'] / jnp.sqrt(p['var'] + BN_EPS)              # (C,)
        wk = jnp.transpose(p['w'], (2, 1, 0)) * scale[None, None]     # (k,768,C)
        sk = (p['b'] - p['mean']) * scale + p['beta']                 # (C,)
        w_tap = w_tap.at[:k, :, bi * channel:(bi + 1) * channel].set(wk)
        shift = shift.at[bi * channel:(bi + 1) * channel].set(sk)
    # NOTE: taps j >= k MUST stay exactly zero; the fused roll/mask scheme
    # relies on it.
    w_pairs = jnp.concatenate([w_tap[0::2], w_tap[1::2]], axis=-1)    # (4,768,256)
    return w_pairs.astype(jnp.bfloat16), shift[None, :]


# ----------------------------- references ------------------------------------

_HI = jax.lax.Precision.HIGHEST


def fast_cnn_reference_f32(x, params, channel=CHANNEL):
    """PyTorch-faithful eval-mode reference in f32: conv -> BN -> ReLU -> max."""
    outs = []
    _, seq_len, _ = x.shape
    for k in KERNEL_SIZES:
        p = params[k]
        l_out = seq_len - k + 1
        w = jnp.transpose(p['w'], (2, 1, 0))                          # (k,768,C)
        y = jnp.zeros((x.shape[0], l_out, channel), jnp.float32)
        for j in range(k):
            y = y + jnp.einsum('bld,dc->blc', x[:, j:j + l_out, :], w[j],
                               precision=_HI)
        scale = p['gamma'] / jnp.sqrt(p['var'] + BN_EPS)
        y = (y + p['b'][None, None] - p['mean'][None, None]) * scale[None, None] \
            + p['beta'][None, None]
        outs.append(jnp.max(jnp.maximum(y, 0.0), axis=1))
    return jnp.concatenate(outs, axis=1)


def _unpack_taps(w_pairs):
    """(4,768,256) -> (8,768,128) f32 in tap order (0..7)."""
    w_even = w_pairs[:, :, :C_TOT]
    w_odd = w_pairs[:, :, C_TOT:]
    return jnp.stack([w_even, w_odd], axis=1).reshape(KMAX, D_IN, C_TOT) \
              .astype(jnp.float32)


def fast_cnn_reference_folded(x, w_pairs, shift, channel=CHANNEL):
    """Reference on the exact bf16 folded params / bf16-rounded activations
    the kernel consumes."""
    xf = x.astype(jnp.bfloat16).astype(jnp.float32)
    wt = _unpack_taps(w_pairs)
    _, seq_len, _ = xf.shape
    outs = []
    for bi, k in enumerate(KERNEL_SIZES):
        sl = slice(bi * channel, (bi + 1) * channel)
        l_out = seq_len - k + 1
        y = jnp.zeros((xf.shape[0], l_out, channel), jnp.float32)
        for j in range(k):
            y = y + jnp.einsum('bld,dc->blc', xf[:, j:j + l_out, :],
                               wt[j, :, sl], precision=_HI)
        outs.append(jnp.max(jnp.maximum(y + shift[:, sl][None], 0.0), axis=1))
    return jnp.concatenate(outs, axis=1)


# --------------------------------- main ---------------------------------------

if __name__ == "__main__":
    B, L = 2, 16                       # small seq; feature dim fixed at 768
    key = jax.random.PRNGKey(0)
    key, kx = jax.random.split(key)
    x = jax.random.normal(kx, (B, L, D_IN), jnp.float32)

    params = init_torch_like_params(key)
    w_pairs, shift = fold_params(params)

    out = fast_cnn_forward(x, w_pairs, shift)
    out = jax.block_until_ready(out)
    assert out.shape == (B, C_TOT), out.shape

    # Tight check: same bf16 folded params the kernel sees (validates the
    # tap-pair matmul / roll / mask / max structure).
    ref_folded = fast_cnn_reference_folded(x, w_pairs, shift)
    assert jnp.allclose(out, ref_folded, atol=2e-3, rtol=2e-3), \
        float(jnp.max(jnp.abs(out - ref_folded)))

    # Loose check: full-f32 PyTorch semantics (slack covers bf16 quantization).
    ref_f32 = fast_cnn_reference_f32(x, params)
    assert jnp.allclose(out, ref_f32, atol=5e-2, rtol=5e-2), \
        float(jnp.max(jnp.abs(out - ref_f32)))

    # Ragged-last-block path: batch not divisible by block_b exercises the
    # in-kernel row mask that replaced the wrapper-side jnp.pad.
    key, kx2 = jax.random.split(key)
    B2 = 5
    x2 = jax.random.normal(kx2, (B2, L, D_IN), jnp.float32)
    out2 = jax.block_until_ready(fast_cnn_forward(x2, w_pairs, shift, block_b=2))
    ref2 = fast_cnn_reference_folded(x2, w_pairs, shift)
    assert out2.shape == (B2, C_TOT), out2.shape
    assert jnp.allclose(out2, ref2, atol=2e-3, rtol=2e-3), \
        float(jnp.max(jnp.abs(out2 - ref2)))

    print("KERNEL_OK")
</pallas_src>

<mosaic_0001>
module attributes {stable_mosaic.version = 11 : i64} {
  func.func @_fused_fastcnn_kernel(%arg0: i32, %arg1: memref<2x16x768xf32, #tpu.memory_space<vmem>>, %arg2: memref<4x768x256xbf16, #tpu.memory_space<vmem>>, %arg3: memref<1x128xf32, #tpu.memory_space<vmem>>, %arg4: memref<16x128xf32, #tpu.memory_space<vmem>>, %arg5: memref<1x2x128xf32, #tpu.memory_space<vmem>>) attributes {dimension_semantics = [#tpu.dimension_semantics<parallel>], iteration_bounds = array<i64: 1>, scalar_prefetch = 0 : i64, scratch_operands = 0 : i64, tpu.core_type = #tpu.core_type<tc>, window_params = [{transform_indices = @transform_0, window_bounds = array<i64: 2, 16, 768>}, {pipeline_mode = #tpu.pipeline_mode<synchronous>, transform_indices = @transform_1, window_bounds = array<i64: 4, 768, 256>}, {pipeline_mode = #tpu.pipeline_mode<synchronous>, transform_indices = @transform_2, window_bounds = array<i64: 1, 128>}, {pipeline_mode = #tpu.pipeline_mode<synchronous>, transform_indices = @transform_3, window_bounds = array<i64: 16, 128>}, {transform_indices = @transform_4, window_bounds = array<i64: 1, 2, 128>}]} {
    %c0 = arith.constant 0 : index
    %c0_0 = arith.constant 0 : index
    %c0_1 = arith.constant 0 : index
    %0 = vector.load %arg1[%c0, %c0_0, %c0_1] : memref<2x16x768xf32, #tpu.memory_space<vmem>>, vector<2x16x768xf32>
    %1 = vector.shape_cast %0 : vector<2x16x768xf32> to vector<32x768xf32>
    %2 = arith.truncf %1 : vector<32x768xf32> to vector<32x768xbf16>
    %c0_2 = arith.constant 0 : index
    %c0_3 = arith.constant 0 : index
    %c0_4 = arith.constant 0 : index
    %3 = vector.load %arg2[%c0_2, %c0_3, %c0_4] : memref<4x768x256xbf16, #tpu.memory_space<vmem>>, vector<1x768x256xbf16>
    %4 = vector.shape_cast %3 : vector<1x768x256xbf16> to vector<768x256xbf16>
    %cst = arith.constant dense<0.000000e+00> : vector<32x256xf32>
    %5 = tpu.matmul %2, %4, %cst {dimension_numbers = #tpu.dot_dimension_numbers<[1], [0], [0], [1], [0, 0, 1, 1], [], []>} : vector<32x768xbf16>, vector<768x256xbf16>, vector<32x256xf32> -> vector<32x256xf32>
    %6 = vector.extract_strided_slice %5 {offsets = [0, 0], sizes = [32, 128], strides = [1, 1]} : vector<32x256xf32> to vector<32x128xf32>
    %7 = vector.extract_strided_slice %5 {offsets = [0, 128], sizes = [32, 128], strides = [1, 1]} : vector<32x256xf32> to vector<32x128xf32>
    %c31_i32 = arith.constant 31 : i32
    %8 = tpu.dynamic_rotate %7 by %c31_i32 dim 0 : vector<32x128xf32>, i32 -> vector<32x128xf32>
    %9 = arith.addf %6, %8 : vector<32x128xf32>
    %c1 = arith.constant 1 : index
    %c0_5 = arith.constant 0 : index
    %c0_6 = arith.constant 0 : index
    %10 = vector.load %arg2[%c1, %c0_5, %c0_6] : memref<4x768x256xbf16, #tpu.memory_space<vmem>>, vector<1x768x256xbf16>
    %11 = vector.shape_cast %10 : vector<1x768x256xbf16> to vector<768x256xbf16>
    %cst_7 = arith.constant dense<0.000000e+00> : vector<32x256xf32>
    %12 = tpu.matmul %2, %11, %cst_7 {dimension_numbers = #tpu.dot_dimension_numbers<[1], [0], [0], [1], [0, 0, 1, 1], [], []>} : vector<32x768xbf16>, vector<768x256xbf16>, vector<32x256xf32> -> vector<32x256xf32>
    %13 = vector.extract_strided_slice %12 {offsets = [0, 0], sizes = [32, 128], strides = [1, 1]} : vector<32x256xf32> to vector<32x128xf32>
    %14 = vector.extract_strided_slice %12 {offsets = [0, 128], sizes = [32, 128], strides = [1, 1]} : vector<32x256xf32> to vector<32x128xf32>
    %c30_i32 = arith.constant 30 : i32
    %15 = tpu.dynamic_rotate %13 by %c30_i32 dim 0 : vector<32x128xf32>, i32 -> vector<32x128xf32>
    %c29_i32 = arith.constant 29 : i32
    %16 = tpu.dynamic_rotate %14 by %c29_i32 dim 0 : vector<32x128xf32>, i32 -> vector<32x128xf32>
    %17 = arith.addf %15, %16 : vector<32x128xf32>
    %18 = arith.addf %9, %17 : vector<32x128xf32>
    %c2 = arith.constant 2 : index
    %c0_8 = arith.constant 0 : index
    %c0_9 = arith.constant 0 : index
    %19 = vector.load %arg2[%c2, %c0_8, %c0_9] : memref<4x768x256xbf16, #tpu.memory_space<vmem>>, vector<1x768x256xbf16>
    %20 = vector.shape_cast %19 : vector<1x768x256xbf16> to vector<768x256xbf16>
    %cst_10 = arith.constant dense<0.000000e+00> : vector<32x256xf32>
    %21 = tpu.matmul %2, %20, %cst_10 {dimension_numbers = #tpu.dot_dimension_numbers<[1], [0], [0], [1], [0, 0, 1, 1], [], []>} : vector<32x768xbf16>, vector<768x256xbf16>, vector<32x256xf32> -> vector<32x256xf32>
    %22 = vector.extract_strided_slice %21 {offsets = [0, 0], sizes = [32, 128], strides = [1, 1]} : vector<32x256xf32> to vector<32x128xf32>
    %23 = vector.extract_strided_slice %21 {offsets = [0, 128], sizes = [32, 128], strides = [1, 1]} : vector<32x256xf32> to vector<32x128xf32>
    %c28_i32 = arith.constant 28 : i32
    %24 = tpu.dynamic_rotate %22 by %c28_i32 dim 0 : vector<32x128xf32>, i32 -> vector<32x128xf32>
    %c27_i32 = arith.constant 27 : i32
    %25 = tpu.dynamic_rotate %23 by %c27_i32 dim 0 : vector<32x128xf32>, i32 -> vector<32x128xf32>
    %26 = arith.addf %24, %25 : vector<32x128xf32>
    %27 = arith.addf %18, %26 : vector<32x128xf32>
    %c3 = arith.constant 3 : index
    %c0_11 = arith.constant 0 : index
    %c0_12 = arith.constant 0 : index
    %28 = vector.load %arg2[%c3, %c0_11, %c0_12] : memref<4x768x256xbf16, #tpu.memory_space<vmem>>, vector<1x768x256xbf16>
    %29 = vector.shape_cast %28 : vector<1x768x256xbf16> to vector<768x256xbf16>
    %cst_13 = arith.constant dense<0.000000e+00> : vector<32x256xf32>
    %30 = tpu.matmul %2, %29, %cst_13 {dimension_numbers = #tpu.dot_dimension_numbers<[1], [0], [0], [1], [0, 0, 1, 1], [], []>} : vector<32x768xbf16>, vector<768x256xbf16>, vector<32x256xf32> -> vector<32x256xf32>
    %31 = vector.extract_strided_slice %30 {offsets = [0, 0], sizes = [32, 128], strides = [1, 1]} : vector<32x256xf32> to vector<32x128xf32>
    %32 = vector.extract_strided_slice %30 {offsets = [0, 128], sizes = [32, 128], strides = [1, 1]} : vector<32x256xf32> to vector<32x128xf32>
    %c26_i32 = arith.constant 26 : i32
    %33 = tpu.dynamic_rotate %31 by %c26_i32 dim 0 : vector<32x128xf32>, i32 -> vector<32x128xf32>
    %c25_i32 = arith.constant 25 : i32
    %34 = tpu.dynamic_rotate %32 by %c25_i32 dim 0 : vector<32x128xf32>, i32 -> vector<32x128xf32>
    %35 = arith.addf %33, %34 : vector<32x128xf32>
    %36 = arith.addf %27, %35 : vector<32x128xf32>
    %c0_14 = arith.constant 0 : index
    %c0_15 = arith.constant 0 : index
    %37 = vector.load %arg3[%c0_14, %c0_15] : memref<1x128xf32, #tpu.memory_space<vmem>>, vector<1x128xf32>
    %38 = vector.broadcast %37 : vector<1x128xf32> to vector<32x128xf32>
    %39 = arith.addf %36, %38 : vector<32x128xf32>
    %cst_16 = arith.constant 0.000000e+00 : f32
    %40 = vector.broadcast %cst_16 : f32 to vector<32x128xf32>
    %41 = arith.maximumf %39, %40 : vector<32x128xf32>
    %42 = vector.shape_cast %41 : vector<32x128xf32> to vector<2x16x128xf32>
    %c0_17 = arith.constant 0 : index
    %c0_18 = arith.constant 0 : index
    %43 = vector.load %arg4[%c0_17, %c0_18] : memref<16x128xf32, #tpu.memory_space<vmem>>, vector<16x128xf32>
    %44 = vector.shape_cast %43 : vector<16x128xf32> to vector<1x16x128xf32>
    %cst_19 = arith.constant 5.000000e-01 : f32
    %45 = vector.broadcast %cst_19 : f32 to vector<1x16x128xf32>
    %46 = arith.cmpf ogt, %44, %45 : vector<1x16x128xf32>
    %cst_20 = arith.constant 0.000000e+00 : f32
    %47 = vector.shape_cast %46 : vector<1x16x128xi1> to vector<1x16x128xi1>
    %48 = vector.broadcast %47 : vector<1x16x128xi1> to vector<2x16x128xi1>
    %49 = vector.broadcast %cst_20 : f32 to vector<2x16x128xf32>
    %50 = arith.select %48, %42, %49 : vector<2x16x128xi1>, vector<2x16x128xf32>
    %cst_21 = arith.constant dense<0xFF800000> : vector<2x128xf32>
    %51 = vector.multi_reduction <maximumf>, %50, %cst_21 [1] : vector<2x16x128xf32> to vector<2x128xf32>
    %c0_22 = arith.constant 0 : index
    %c0_23 = arith.constant 0 : index
    %c0_24 = arith.constant 0 : index
    %52 = vector.load %arg5[%c0_22, %c0_23, %c0_24] : memref<1x2x128xf32, #tpu.memory_space<vmem>>, vector<1x2x128xf32>
    %53 = vector.shape_cast %52 : vector<1x2x128xf32> to vector<2x128xf32>
    %54 = vector.shape_cast %51 : vector<2x128xf32> to vector<1x2x128xf32>
    tpu.vector_store %arg5[%c0_22, %c0_23, %c0_24], %54 {strides = array<i32>} : memref<1x2x128xf32, #tpu.memory_space<vmem>>, vector<1x2x128xf32>,
    return
  }
  func.func @transform_0(%arg0: i32) -> (i32, i32, i32) {
    %c0_i32 = arith.constant 0 : i32
    %c0_i32_0 = arith.constant 0 : i32
    %c0_i32_1 = arith.constant 0 : i32
    return %arg0, %c0_i32, %c0_i32_0 : i32, i32, i32
  }
  func.func @transform_1(%arg0: i32) -> (i32, i32, i32) {
    %c0_i32 = arith.constant 0 : i32
    %c0_i32_0 = arith.constant 0 : i32
    %c0_i32_1 = arith.constant 0 : i32
    %c0_i32_2 = arith.constant 0 : i32
    return %c0_i32, %c0_i32_0, %c0_i32_1 : i32, i32, i32
  }
  func.func @transform_2(%arg0: i32) -> (i32, i32) {
    %c0_i32 = arith.constant 0 : i32
    %c0_i32_0 = arith.constant 0 : i32
    %c0_i32_1 = arith.constant 0 : i32
    return %c0_i32, %c0_i32_0 : i32, i32
  }
  func.func @transform_3(%arg0: i32) -> (i32, i32) {
    %c0_i32 = arith.constant 0 : i32
    %c0_i32_0 = arith.constant 0 : i32
    %c0_i32_1 = arith.constant 0 : i32
    return %c0_i32, %c0_i32_0 : i32, i32
  }
  func.func @transform_4(%arg0: i32) -> (i32, i32, i32) {
    %c0_i32 = arith.constant 0 : i32
    %c0_i32_0 = arith.constant 0 : i32
    %c0_i32_1 = arith.constant 0 : i32
    return %arg0, %c0_i32, %c0_i32_0 : i32, i32, i32
  }
}

</mosaic_0001>

<llo_original>
// kernel: tpu_custom_call.1
$region0: #{tpu_custom_call.1}
  #allocation0 [shape = 'u32[]', space=smem, size = 0x4, offset = 0x4, fixed_abs, tag = 'smem constant byte address 0x4 - core index']
  #allocation1 [shape = 'u32[144,128]{1,0:T(1,128)}', space=vmem, size = 0x12000, scoped, tag = 'internal scratch']
  %s0 = inlined_call_operand.hbm [shape: f32[2,16,768], index: 0, kind: input, shape index: {}]
  %s1 = inlined_call_operand.hbm [shape: bf16[4,768,256], index: 1, kind: input, shape index: {}]
  %s2 = inlined_call_operand.hbm [shape: f32[1,128], index: 2, kind: input, shape index: {}]
  %s3 = inlined_call_operand.hbm [shape: f32[16,128], index: 3, kind: input, shape index: {}]
  %s4 = inlined_call_operand.hbm [shape: f32[1,2,128], index: 4, kind: output, shape index: {}]
  %s5 = sld [smem:[#allocation0]]
  $region42: #{tpu_custom_call.1} parent=0
    _
  %s7 = ssub.s32 1, %s5
  %s8 = scalar_select 0, %s7, %s5
  $region1: #{tpu_custom_call.1} parent=0
    #allocation2 [shape = 'u8[98304]{0}', space=vmem, size = 0x18000, scoped, tag = 'input window, operand 0, single buffered']
    #allocation3 [shape = 's32[1]{0}', space=sflag, size = 0x4, scoped, tag = 'scoped memory for tpu_custom_call.1']
    #allocation4 [shape = 's32[1]{0}', space=sflag, size = 0x4, scoped, tag = 'scoped memory for tpu_custom_call.1']
    #allocation5 [shape = 'u8[1572864]{0}', space=vmem, size = 0x180000, scoped, tag = 'input window, operand 1, single buffered']
    #allocation6 [shape = 's32[1]{0}', space=sflag, size = 0x4, scoped, tag = 'scoped memory for tpu_custom_call.1']
    #allocation7 [shape = 'u8[512]{0}', space=vmem, size = 0x400, scoped, tag = 'input window, operand 2, single buffered']
    #allocation8 [shape = 'u8[8192]{0}', space=vmem, size = 0x2000, scoped, tag = 'input window, operand 3, single buffered']
    #allocation9 [shape = 's32[1]{0}', space=sflag, size = 0x4, scoped, tag = 'scoped memory for tpu_custom_call.1']
    #allocation10 [shape = 'u8[1024]{0}', space=vmem, size = 0x400, scoped, tag = 'output window, operand 0, single buffered']
    %9 = vsyncpa [#allocation3], 0
    %10 = vsyncpa [#allocation6], 0
    %11 = vsyncpa [#allocation9], 0
    %12 = vsyncpa [#allocation4], 0
    // Predicated region
    $region2: #{tpu_custom_call.1} parent=1 // pred_check
      _
    $region3: #{tpu_custom_call.1} parent=1 // pred_check_branch
      %14 = sbr.rel (0) target = $region5
    $region4: #{tpu_custom_call.1} parent=1 // pred_region
      %s16 = ssub.s32 3072, 3072
      %17 = vsyncadd [#allocation3], %s16
      %s18 = sshll.u32 [#allocation2], 4
      %s19 = int_to_ptr.vmem [resolvable:$true] %s18
      %24 = dma.hbm_to_vmem [thread:$0]  %s0, 3072, %s19, [#allocation3], 768, 768, 48
    $region5: #{tpu_custom_call.1} parent=1 // pred_fallthru
      _
    // Predicated region
    $region6: #{tpu_custom_call.1} parent=1 // pred_check
      _
    $region7: #{tpu_custom_call.1} parent=1 // pred_check_branch
      %26 = sbr.rel (0) target = $region9
    $region8: #{tpu_custom_call.1} parent=1 // pred_region
      %s28 = ssub.s32 49152, 49152
      %29 = vsyncadd [#allocation6], %s28
      %s30 = sshll.u32 [#allocation5], 4
      %s31 = int_to_ptr.vmem [resolvable:$true] %s30
      %36 = dma.hbm_to_vmem [thread:$0]  %s1, 49152, %s31, [#allocation6], 128, 128, 8
    $region9: #{tpu_custom_call.1} parent=1 // pred_fallthru
      _
    // Predicated region
    $region10: #{tpu_custom_call.1} parent=1 // pred_check
      _
    $region11: #{tpu_custom_call.1} parent=1 // pred_check_branch
      %38 = sbr.rel (0) target = $region13
    $region12: #{tpu_custom_call.1} parent=1 // pred_region
      %s40 = ssub.s32 16, 16
      %41 = vsyncadd [#allocation6], %s40
      %s43 = sshll.u32 [#allocation7], 4
      %s44 = int_to_ptr.vmem [resolvable:$true] %s43
      %46 = dma.hbm_to_vmem [thread:$0]  %s2, 16, %s44, [#allocation6]
    $region13: #{tpu_custom_call.1} parent=1 // pred_fallthru
      _
    // Predicated region
    $region14: #{tpu_custom_call.1} parent=1 // pred_check
      _
    $region15: #{tpu_custom_call.1} parent=1 // pred_check_branch
      %48 = sbr.rel (0) target = $region17
    $region16: #{tpu_custom_call.1} parent=1 // pred_region
      %s50 = ssub.s32 256, 256
      %51 = vsyncadd [#allocation9], %s50
      %s52 = sshll.u32 [#allocation8], 4
      %s53 = int_to_ptr.vmem [resolvable:$true] %s52
      %58 = dma.hbm_to_vmem [thread:$0]  %s3, 256, %s53, [#allocation9], 128, 128, 8
    $region17: #{tpu_custom_call.1} parent=1 // pred_fallthru
      _
    // Predicated region
    $region18: #{tpu_custom_call.1} parent=1 // pred_check
      _
    $region19: #{tpu_custom_call.1} parent=1 // pred_check_branch
      %60 = sbr.rel (0) target = $region21
    $region20: #{tpu_custom_call.1} parent=1 // pred_region
      %61 = dma.done [#allocation3], 3072
    $region21: #{tpu_custom_call.1} parent=1 // pred_fallthru
      _
    // Predicated region
    $region22: #{tpu_custom_call.1} parent=1 // pred_check
      _
    $region23: #{tpu_custom_call.1} parent=1 // pred_check_branch
      %63 = sbr.rel (0) target = $region25
    $region24: #{tpu_custom_call.1} parent=1 // pred_region
      %64 = dma.done [#allocation6], 49152
    $region25: #{tpu_custom_call.1} parent=1 // pred_fallthru
      _
    // Predicated region
    $region26: #{tpu_custom_call.1} parent=1 // pred_check
      _
    $region27: #{tpu_custom_call.1} parent=1 // pred_check_branch
      %66 = sbr.rel (0) target = $region29
    $region28: #{tpu_custom_call.1} parent=1 // pred_region
      %67 = dma.done [#allocation6], 16
    $region29: #{tpu_custom_call.1} parent=1 // pred_fallthru
      _
    // Predicated region
    $region30: #{tpu_custom_call.1} parent=1 // pred_check
      _
    $region31: #{tpu_custom_call.1} parent=1 // pred_check_branch
      %69 = sbr.rel (0) target = $region33
    $region32: #{tpu_custom_call.1} parent=1 // pred_region
      %70 = dma.done [#allocation9], 256
    $region33: #{tpu_custom_call.1} parent=1 // pred_fallthru
      _
    %v71 = vld [vmem:[#allocation2] sm:$0xff]
    %v72 = vld [vmem:[#allocation2 + $0x8] sm:$0xff]
    %v73 = vld [vmem:[#allocation2 + $0x10] sm:$0xff]
    %v74 = vld [vmem:[#allocation2 + $0x18] sm:$0xff]
    %v75 = vld [vmem:[#allocation2 + $0x20] sm:$0xff]
    %v76 = vld [vmem:[#allocation2 + $0x28] sm:$0xff]
    %v77 = vld [vmem:[#allocation2 + $0x30] sm:$0xff]
    %v78 = vld [vmem:[#allocation2 + $0x38] sm:$0xff]
    %v79 = vld [vmem:[#allocation2 + $0x40] sm:$0xff]
    %v80 = vld [vmem:[#allocation2 + $0x48] sm:$0xff]
    %v81 = vld [vmem:[#allocation2 + $0x50] sm:$0xff]
    %v82 = vld [vmem:[#allocation2 + $0x58] sm:$0xff]
    %v83 = vld [vmem:[#allocation2 + $0x60] sm:$0xff]
    %v84 = vld [vmem:[#allocation2 + $0x68] sm:$0xff]
    %v85 = vld [vmem:[#allocation2 + $0x70] sm:$0xff]
    %v86 = vld [vmem:[#allocation2 + $0x78] sm:$0xff]
    %v87 = vld [vmem:[#allocation2 + $0x80] sm:$0xff]
    %v88 = vld [vmem:[#allocation2 + $0x88] sm:$0xff]
    %v89 = vld [vmem:[#allocation2 + $0x90] sm:$0xff]
    %v90 = vld [vmem:[#allocation2 + $0x98] sm:$0xff]
    %v91 = vld [vmem:[#allocation2 + $0xa0] sm:$0xff]
    %v92 = vld [vmem:[#allocation2 + $0xa8] sm:$0xff]
    %v93 = vld [vmem:[#allocation2 + $0xb0] sm:$0xff]
    %v94 = vld [vmem:[#allocation2 + $0xb8] sm:$0xff]
    %v95 = vpack.c.bf16 %v77, %v71
    %v96 = vpack.c.bf16 %v78, %v72
    %v97 = vpack.c.bf16 %v79, %v73
    %v98 = vpack.c.bf16 %v80, %v74
    %v99 = vpack.c.bf16 %v81, %v75
    %v100 = vpack.c.bf16 %v82, %v76
    %v101 = vpack.c.bf16 %v89, %v83
    %v102 = vpack.c.bf16 %v90, %v84
    %v103 = vpack.c.bf16 %v91, %v85
    %v104 = vpack.c.bf16 %v92, %v86
    %v105 = vpack.c.bf16 %v93, %v87
    %v106 = vpack.c.bf16 %v94, %v88
    %v107 = vld [vmem:[#allocation5] sm:$0xff]
    %v108 = vld [vmem:[#allocation5 + $0x8] sm:$0xff]
    %v109 = vld [vmem:[#allocation5 + $0x10] sm:$0xff]
    %v110 = vld [vmem:[#allocation5 + $0x18] sm:$0xff]
    %v111 = vld [vmem:[#allocation5 + $0x20] sm:$0xff]
    %v112 = vld [vmem:[#allocation5 + $0x28] sm:$0xff]
    %v113 = vld [vmem:[#allocation5 + $0x30] sm:$0xff]
    %v114 = vld [vmem:[#allocation5 + $0x38] sm:$0xff]
    %v115 = vld [vmem:[#allocation5 + $0x40] sm:$0xff]
    %v116 = vld [vmem:[#allocation5 + $0x48] sm:$0xff]
    %v117 = vld [vmem:[#allocation5 + $0x50] sm:$0xff]
    %v118 = vld [vmem:[#allocation5 + $0x58] sm:$0xff]
    %v119 = vld [vmem:[#allocation5 + $0x60] sm:$0xff]
    %v120 = vld [vmem:[#allocation5 + $0x68] sm:$0xff]
    %v121 = vld [vmem:[#allocation5 + $0x70] sm:$0xff]
    %v122 = vld [vmem:[#allocation5 + $0x78] sm:$0xff]
    %v123 = vld [vmem:[#allocation5 + $0x80] sm:$0xff]
    %v124 = vld [vmem:[#allocation5 + $0x88] sm:$0xff]
    %v125 = vld [vmem:[#allocation5 + $0x90] sm:$0xff]
    %v126 = vld [vmem:[#allocation5 + $0x98] sm:$0xff]
    %v127 = vld [vmem:[#allocation5 + $0xa0] sm:$0xff]
    %v128 = vld [vmem:[#allocation5 + $0xa8] sm:$0xff]
    %v129 = vld [vmem:[#allocation5 + $0xb0] sm:$0xff]
    %v130 = vld [vmem:[#allocation5 + $0xb8] sm:$0xff]
    %v131 = vld [vmem:[#allocation5 + $0xc0] sm:$0xff]
    %v132 = vld [vmem:[#allocation5 + $0xc8] sm:$0xff]
    %v133 = vld [vmem:[#allocation5 + $0xd0] sm:$0xff]
    %v134 = vld [vmem:[#allocation5 + $0xd8] sm:$0xff]
    %v135 = vld [vmem:[#allocation5 + $0xe0] sm:$0xff]
    %v136 = vld [vmem:[#allocation5 + $0xe8] sm:$0xff]
    %v137 = vld [vmem:[#allocation5 + $0xf0] sm:$0xff]
    %v138 = vld [vmem:[#allocation5 + $0xf8] sm:$0xff]
    %v139 = vld [vmem:[#allocation5 + $0x100] sm:$0xff]
    %v140 = vld [vmem:[#allocation5 + $0x108] sm:$0xff]
    %v141 = vld [vmem:[#allocation5 + $0x110] sm:$0xff]
    %v142 = vld [vmem:[#allocation5 + $0x118] sm:$0xff]
    %v143 = vld [vmem:[#allocation5 + $0x120] sm:$0xff]
    %v144 = vld [vmem:[#allocation5 + $0x128] sm:$0xff]
    %v145 = vld [vmem:[#allocation5 + $0x130] sm:$0xff]
    %v146 = vld [vmem:[#allocation5 + $0x138] sm:$0xff]
    %v147 = vld [vmem:[#allocation5 + $0x140] sm:$0xff]
    %v148 = vld [vmem:[#allocation5 + $0x148] sm:$0xff]
    %v149 = vld [vmem:[#allocation5 + $0x150] sm:$0xff]
    %v150 = vld [vmem:[#allocation5 + $0x158] sm:$0xff]
    %v151 = vld [vmem:[#allocation5 + $0x160] sm:$0xff]
    %v152 = vld [vmem:[#allocation5 + $0x168] sm:$0xff]
    %v153 = vld [vmem:[#allocation5 + $0x170] sm:$0xff]
    %v154 = vld [vmem:[#allocation5 + $0x178] sm:$0xff]
    %v155 = vld [vmem:[#allocation5 + $0x180] sm:$0xff]
    %v156 = vld [vmem:[#allocation5 + $0x188] sm:$0xff]
    %v157 = vld [vmem:[#allocation5 + $0x190] sm:$0xff]
    %v158 = vld [vmem:[#allocation5 + $0x198] sm:$0xff]
    %v159 = vld [vmem:[#allocation5 + $0x1a0] sm:$0xff]
    %v160 = vld [vmem:[#allocation5 + $0x1a8] sm:$0xff]
    %v161 = vld [vmem:[#allocation5 + $0x1b0] sm:$0xff]
    %v162 = vld [vmem:[#allocation5 + $0x1b8] sm:$0xff]
    %v163 = vld [vmem:[#allocation5 + $0x1c0] sm:$0xff]
    %v164 = vld [vmem:[#allocation5 + $0x1c8] sm:$0xff]
    %v165 = vld [vmem:[#allocation5 + $0x1d0] sm:$0xff]
    %v166 = vld [vmem:[#allocation5 + $0x1d8] sm:$0xff]
    %v167 = vld [vmem:[#allocation5 + $0x1e0] sm:$0xff]
    %v168 = vld [vmem:[#allocation5 + $0x1e8] sm:$0xff]
    %v169 = vld [vmem:[#allocation5 + $0x1f0] sm:$0xff]
    %v170 = vld [vmem:[#allocation5 + $0x1f8] sm:$0xff]
    %v171 = vld [vmem:[#allocation5 + $0x200] sm:$0xff]
    %v172 = vld [vmem:[#allocation5 + $0x208] sm:$0xff]
    %v173 = vld [vmem:[#allocation5 + $0x210] sm:$0xff]
    %v174 = vld [vmem:[#allocation5 + $0x218] sm:$0xff]
    %v175 = vld [vmem:[#allocation5 + $0x220] sm:$0xff]
    %v176 = vld [vmem:[#allocation5 + $0x228] sm:$0xff]
    %v177 = vld [vmem:[#allocation5 + $0x230] sm:$0xff]
    %v178 = vld [vmem:[#allocation5 + $0x238] sm:$0xff]
    %v179 = vld [vmem:[#allocation5 + $0x240] sm:$0xff]
    %v180 = vld [vmem:[#allocation5 + $0x248] sm:$0xff]
    %v181 = vld [vmem:[#allocation5 + $0x250] sm:$0xff]
    %v182 = vld [vmem:[#allocation5 + $0x258] sm:$0xff]
    %v183 = vld [vmem:[#allocation5 + $0x260] sm:$0xff]
    %v184 = vld [vmem:[#allocation5 + $0x268] sm:$0xff]
    %v185 = vld [vmem:[#allocation5 + $0x270] sm:$0xff]
    %v186 = vld [vmem:[#allocation5 + $0x278] sm:$0xff]
    %v187 = vld [vmem:[#allocation5 + $0x280] sm:$0xff]
    %v188 = vld [vmem:[#allocation5 + $0x288] sm:$0xff]
    %v189 = vld [vmem:[#allocation5 + $0x290] sm:$0xff]
    %v190 = vld [vmem:[#allocation5 + $0x298] sm:$0xff]
    %v191 = vld [vmem:[#allocation5 + $0x2a0] sm:$0xff]
    %v192 = vld [vmem:[#allocation5 + $0x2a8] sm:$0xff]
    %v193 = vld [vmem:[#allocation5 + $0x2b0] sm:$0xff]
    %v194 = vld [vmem:[#allocation5 + $0x2b8] sm:$0xff]
    %v195 = vld [vmem:[#allocation5 + $0x2c0] sm:$0xff]
    %v196 = vld [vmem:[#allocation5 + $0x2c8] sm:$0xff]
    %v197 = vld [vmem:[#allocation5 + $0x2d0] sm:$0xff]
    %v198 = vld [vmem:[#allocation5 + $0x2d8] sm:$0xff]
    %v199 = vld [vmem:[#allocation5 + $0x2e0] sm:$0xff]
    %v200 = vld [vmem:[#allocation5 + $0x2e8] sm:$0xff]
    %v201 = vld [vmem:[#allocation5 + $0x2f0] sm:$0xff]
    %v202 = vld [vmem:[#allocation5 + $0x2f8] sm:$0xff]
    %v299 = vunpack.c.l.b16 %v107
    %v300 = vunpack.c.h.b16 %v107
    %v301 = vunpack.c.l.b16 %v108
    %v302 = vunpack.c.h.b16 %v108
    %v303 = vunpack.c.l.b16 %v109
    %v304 = vunpack.c.h.b16 %v109
    %v305 = vunpack.c.l.b16 %v110
    %v306 = vunpack.c.h.b16 %v110
    %v307 = vunpack.c.l.b16 %v111
    %v308 = vunpack.c.h.b16 %v111
    %v309 = vunpack.c.l.b16 %v112
    %v310 = vunpack.c.h.b16 %v112
    %v311 = vunpack.c.l.b16 %v113
    %v312 = vunpack.c.h.b16 %v113
    %v313 = vunpack.c.l.b16 %v114
    %v314 = vunpack.c.h.b16 %v114
    %v315 = vunpack.c.l.b16 %v115
    %v316 = vunpack.c.h.b16 %v115
    %v317 = vunpack.c.l.b16 %v116
    %v318 = vunpack.c.h.b16 %v116
    %v319 = vunpack.c.l.b16 %v117
    %v320 = vunpack.c.h.b16 %v117
    %v321 = vunpack.c.l.b16 %v118
    %v322 = vunpack.c.h.b16 %v118
    %v323 = vunpack.c.l.b16 %v119
    %v324 = vunpack.c.h.b16 %v119
    %v325 = vunpack.c.l.b16 %v120
    %v326 = vunpack.c.h.b16 %v120
    %v327 = vunpack.c.l.b16 %v121
    %v328 = vunpack.c.h.b16 %v121
    %v329 = vunpack.c.l.b16 %v122
    %v330 = vunpack.c.h.b16 %v122
    %v331 = vunpack.c.l.b16 %v123
    %v332 = vunpack.c.h.b16 %v123
    %v333 = vunpack.c.l.b16 %v124
    %v334 = vunpack.c.h.b16 %v124
    %v335 = vunpack.c.l.b16 %v125
    %v336 = vunpack.c.h.b16 %v125
    %v337 = vunpack.c.l.b16 %v126
    %v338 = vunpack.c.h.b16 %v126
    %v339 = vunpack.c.l.b16 %v127
    %v340 = vunpack.c.h.b16 %v127
    %v341 = vunpack.c.l.b16 %v128
    %v342 = vunpack.c.h.b16 %v128
    %v343 = vunpack.c.l.b16 %v129
    %v344 = vunpack.c.h.b16 %v129
    %v345 = vunpack.c.l.b16 %v130
    %v346 = vunpack.c.h.b16 %v130
    %v347 = vunpack.c.l.b16 %v131
    %v348 = vunpack.c.h.b16 %v131
    %v349 = vunpack.c.l.b16 %v132
    %v350 = vunpack.c.h.b16 %v132
    %v351 = vunpack.c.l.b16 %v133
    %v352 = vunpack.c.h.b16 %v133
    %v353 = vunpack.c.l.b16 %v134
    %v354 = vunpack.c.h.b16 %v134
    %v355 = vunpack.c.l.b16 %v135
    %v356 = vunpack.c.h.b16 %v135
    %v357 = vunpack.c.l.b16 %v136
    %v358 = vunpack.c.h.b16 %v136
    %v359 = vunpack.c.l.b16 %v137
    %v360 = vunpack.c.h.b16 %v137
    %v361 = vunpack.c.l.b16 %v138
    %v362 = vunpack.c.h.b16 %v138
    %v363 = vunpack.c.l.b16 %v139
    %v364 = vunpack.c.h.b16 %v139
    %v365 = vunpack.c.l.b16 %v140
    %v366 = vunpack.c.h.b16 %v140
    %v367 = vunpack.c.l.b16 %v141
    %v368 = vunpack.c.h.b16 %v141
    %v369 = vunpack.c.l.b16 %v142
    %v370 = vunpack.c.h.b16 %v142
    %v371 = vunpack.c.l.b16 %v143
    %v372 = vunpack.c.h.b16 %v143
    %v373 = vunpack.c.l.b16 %v144
    %v374 = vunpack.c.h.b16 %v144
    %v375 = vunpack.c.l.b16 %v145
    %v376 = vunpack.c.h.b16 %v145
    %v377 = vunpack.c.l.b16 %v146
    %v378 = vunpack.c.h.b16 %v146
    %v379 = vunpack.c.l.b16 %v147
    %v380 = vunpack.c.h.b16 %v147
    %v381 = vunpack.c.l.b16 %v148
    %v382 = vunpack.c.h.b16 %v148
    %v383 = vunpack.c.l.b16 %v149
    %v384 = vunpack.c.h.b16 %v149
    %v385 = vunpack.c.l.b16 %v150
    %v386 = vunpack.c.h.b16 %v150
    %v387 = vunpack.c.l.b16 %v151
    %v388 = vunpack.c.h.b16 %v151
    %v389 = vunpack.c.l.b16 %v152
    %v390 = vunpack.c.h.b16 %v152
    %v391 = vunpack.c.l.b16 %v153
    %v392 = vunpack.c.h.b16 %v153
    %v393 = vunpack.c.l.b16 %v154
    %v394 = vunpack.c.h.b16 %v154
    %v395 = vunpack.c.l.b16 %v155
    %v396 = vunpack.c.h.b16 %v155
    %v397 = vunpack.c.l.b16 %v156
    %v398 = vunpack.c.h.b16 %v156
    %v399 = vunpack.c.l.b16 %v157
    %v400 = vunpack.c.h.b16 %v157
    %v401 = vunpack.c.l.b16 %v158
    %v402 = vunpack.c.h.b16 %v158
    %v403 = vunpack.c.l.b16 %v159
    %v404 = vunpack.c.h.b16 %v159
    %v405 = vunpack.c.l.b16 %v160
    %v406 = vunpack.c.h.b16 %v160
    %v407 = vunpack.c.l.b16 %v161
    %v408 = vunpack.c.h.b16 %v161
    %v409 = vunpack.c.l.b16 %v162
    %v410 = vunpack.c.h.b16 %v162
    %v411 = vunpack.c.l.b16 %v163
    %v412 = vunpack.c.h.b16 %v163
    %v413 = vunpack.c.l.b16 %v164
    %v414 = vunpack.c.h.b16 %v164
    %v415 = vunpack.c.l.b16 %v165
    %v416 = vunpack.c.h.b16 %v165
    %v417 = vunpack.c.l.b16 %v166
    %v418 = vunpack.c.h.b16 %v166
    %v419 = vunpack.c.l.b16 %v167
    %v420 = vunpack.c.h.b16 %v167
    %v421 = vunpack.c.l.b16 %v168
    %v422 = vunpack.c.h.b16 %v168
    %v423 = vunpack.c.l.b16 %v169
    %v424 = vunpack.c.h.b16 %v169
    %v425 = vunpack.c.l.b16 %v170
    %v426 = vunpack.c.h.b16 %v170
    %v427 = vunpack.c.l.b16 %v171
    %v428 = vunpack.c.h.b16 %v171
    %v429 = vunpack.c.l.b16 %v172
    %v430 = vunpack.c.h.b16 %v172
    %v431 = vunpack.c.l.b16 %v173
    %v432 = vunpack.c.h.b16 %v173
    %v433 = vunpack.c.l.b16 %v174
    %v434 = vunpack.c.h.b16 %v174
    %v435 = vunpack.c.l.b16 %v175
    %v436 = vunpack.c.h.b16 %v175
    %v437 = vunpack.c.l.b16 %v176
    %v438 = vunpack.c.h.b16 %v176
    %v439 = vunpack.c.l.b16 %v177
    %v440 = vunpack.c.h.b16 %v177
    %v441 = vunpack.c.l.b16 %v178
    %v442 = vunpack.c.h.b16 %v178
    %v443 = vunpack.c.l.b16 %v179
    %v444 = vunpack.c.h.b16 %v179
    %v445 = vunpack.c.l.b16 %v180
    %v446 = vunpack.c.h.b16 %v180
    %v447 = vunpack.c.l.b16 %v181
    %v448 = vunpack.c.h.b16 %v181
    %v449 = vunpack.c.l.b16 %v182
    %v450 = vunpack.c.h.b16 %v182
    %v451 = vunpack.c.l.b16 %v183
    %v452 = vunpack.c.h.b16 %v183
    %v453 = vunpack.c.l.b16 %v184
    %v454 = vunpack.c.h.b16 %v184
    %v455 = vunpack.c.l.b16 %v185
    %v456 = vunpack.c.h.b16 %v185
    %v457 = vunpack.c.l.b16 %v186
    %v458 = vunpack.c.h.b16 %v186
    %v459 = vunpack.c.l.b16 %v187
    %v460 = vunpack.c.h.b16 %v187
    %v461 = vunpack.c.l.b16 %v188
    %v462 = vunpack.c.h.b16 %v188
    %v463 = vunpack.c.l.b16 %v189
    %v464 = vunpack.c.h.b16 %v189
    %v465 = vunpack.c.l.b16 %v190
    %v466 = vunpack.c.h.b16 %v190
    %v467 = vunpack.c.l.b16 %v191
    %v468 = vunpack.c.h.b16 %v191
    %v469 = vunpack.c.l.b16 %v192
    %v470 = vunpack.c.h.b16 %v192
    %v471 = vunpack.c.l.b16 %v193
    %v472 = vunpack.c.h.b16 %v193
    %v473 = vunpack.c.l.b16 %v194
    %v474 = vunpack.c.h.b16 %v194
    %v475 = vunpack.c.l.b16 %v195
    %v476 = vunpack.c.h.b16 %v195
    %v477 = vunpack.c.l.b16 %v196
    %v478 = vunpack.c.h.b16 %v196
    %v479 = vunpack.c.l.b16 %v197
    %v480 = vunpack.c.h.b16 %v197
    %v481 = vunpack.c.l.b16 %v198
    %v482 = vunpack.c.h.b16 %v198
    %v483 = vunpack.c.l.b16 %v199
    %v484 = vunpack.c.h.b16 %v199
    %v485 = vunpack.c.l.b16 %v200
    %v486 = vunpack.c.h.b16 %v200
    %v487 = vunpack.c.l.b16 %v201
    %v488 = vunpack.c.h.b16 %v201
    %v489 = vunpack.c.l.b16 %v202
    %v490 = vunpack.c.h.b16 %v202
    %v491 = vpack.c.b16 %v301, %v299
    %v492 = vpack.c.b16 %v302, %v300
    %v493 = vpack.c.b16 %v305, %v303
    %v494 = vpack.c.b16 %v306, %v304
    %v495 = vpack.c.b16 %v309, %v307
    %v496 = vpack.c.b16 %v310, %v308
    %v497 = vpack.c.b16 %v313, %v311
    %v498 = vpack.c.b16 %v314, %v312
    %v499 = vpack.c.b16 %v317, %v315
    %v500 = vpack.c.b16 %v318, %v316
    %v501 = vpack.c.b16 %v321, %v319
    %v502 = vpack.c.b16 %v322, %v320
    %v503 = vpack.c.b16 %v325, %v323
    %v504 = vpack.c.b16 %v326, %v324
    %v505 = vpack.c.b16 %v329, %v327
    %v506 = vpack.c.b16 %v330, %v328
    %v507 = vpack.c.b16 %v333, %v331
    %v508 = vpack.c.b16 %v334, %v332
    %v509 = vpack.c.b16 %v337, %v335
    %v510 = vpack.c.b16 %v338, %v336
    %v511 = vpack.c.b16 %v341, %v339
    %v512 = vpack.c.b16 %v342, %v340
    %v513 = vpack.c.b16 %v345, %v343
    %v514 = vpack.c.b16 %v346, %v344
    %v515 = vpack.c.b16 %v349, %v347
    %v516 = vpack.c.b16 %v350, %v348
    %v517 = vpack.c.b16 %v353, %v351
    %v518 = vpack.c.b16 %v354, %v352
    %v519 = vpack.c.b16 %v357, %v355
    %v520 = vpack.c.b16 %v358, %v356
    %v521 = vpack.c.b16 %v361, %v359
    %v522 = vpack.c.b16 %v362, %v360
    %v523 = vpack.c.b16 %v365, %v363
    %v524 = vpack.c.b16 %v366, %v364
    %v525 = vpack.c.b16 %v369, %v367
    %v526 = vpack.c.b16 %v370, %v368
    %v527 = vpack.c.b16 %v373, %v371
    %v528 = vpack.c.b16 %v374, %v372
    %v529 = vpack.c.b16 %v377, %v375
    %v530 = vpack.c.b16 %v378, %v376
    %v531 = vpack.c.b16 %v381, %v379
    %v532 = vpack.c.b16 %v382, %v380
    %v533 = vpack.c.b16 %v385, %v383
    %v534 = vpack.c.b16 %v386, %v384
    %v535 = vpack.c.b16 %v389, %v387
    %v536 = vpack.c.b16 %v390, %v388
    %v537 = vpack.c.b16 %v393, %v391
    %v538 = vpack.c.b16 %v394, %v392
    %v539 = vpack.c.b16 %v397, %v395
    %v540 = vpack.c.b16 %v398, %v396
    %v541 = vpack.c.b16 %v401, %v399
    %v542 = vpack.c.b16 %v402, %v400
    %v543 = vpack.c.b16 %v405, %v403
    %v544 = vpack.c.b16 %v406, %v404
    %v545 = vpack.c.b16 %v409, %v407
    %v546 = vpack.c.b16 %v410, %v408
    %v547 = vpack.c.b16 %v413, %v411
    %v548 = vpack.c.b16 %v414, %v412
    %v549 = vpack.c.b16 %v417, %v415
    %v550 = vpack.c.b16 %v418, %v416
    %v551 = vpack.c.b16 %v421, %v419
    %v552 = vpack.c.b16 %v422, %v420
    %v553 = vpack.c.b16 %v425, %v423
    %v554 = vpack.c.b16 %v426, %v424
    %v555 = vpack.c.b16 %v429, %v427
    %v556 = vpack.c.b16 %v430, %v428
    %v557 = vpack.c.b16 %v433, %v431
    %v558 = vpack.c.b16 %v434, %v432
    %v559 = vpack.c.b16 %v437, %v435
    %v560 = vpack.c.b16 %v438, %v436
    %v561 = vpack.c.b16 %v441, %v439
    %v562 = vpack.c.b16 %v442, %v440
    %v563 = vpack.c.b16 %v445, %v443
    %v564 = vpack.c.b16 %v446, %v444
    %v565 = vpack.c.b16 %v449, %v447
    %v566 = vpack.c.b16 %v450, %v448
    %v567 = vpack.c.b16 %v453, %v451
    %v568 = vpack.c.b16 %v454, %v452
    %v569 = vpack.c.b16 %v457, %v455
    %v570 = vpack.c.b16 %v458, %v456
    %v571 = vpack.c.b16 %v461, %v459
    %v572 = vpack.c.b16 %v462, %v460
    %v573 = vpack.c.b16 %v465, %v463
    %v574 = vpack.c.b16 %v466, %v464
    %v575 = vpack.c.b16 %v469, %v467
    %v576 = vpack.c.b16 %v470, %v468
    %v577 = vpack.c.b16 %v473, %v471
    %v578 = vpack.c.b16 %v474, %v472
    %v579 = vpack.c.b16 %v477, %v475
    %v580 = vpack.c.b16 %v478, %v476
    %v581 = vpack.c.b16 %v481, %v479
    %v582 = vpack.c.b16 %v482, %v480
    %v583 = vpack.c.b16 %v485, %v483
    %v584 = vpack.c.b16 %v486, %v484
    %v585 = vpack.c.b16 %v489, %v487
    %v586 = vpack.c.b16 %v490, %v488
    %683 = vmatprep.subr.bf16.mxu0 %v506
    %684 = vmatpush1.bf16.msra.mxu0 %v505
    %685 = vmatprep.subr.bf16.mxu0 %v504
    %686 = vmatpush1.bf16.msra.mxu0 %v503
    %687 = vmatprep.subr.bf16.mxu0 %v502
    %688 = vmatpush1.bf16.msra.mxu0 %v501
    %689 = vmatprep.subr.bf16.mxu0 %v500
    %690 = vmatpush1.bf16.msra.mxu0 %v499
    %691 = vmatprep.subr.bf16.mxu0 %v498
    %692 = vmatpush1.bf16.msra.mxu0 %v497
    %693 = vmatprep.subr.bf16.mxu0 %v496
    %694 = vmatpush1.bf16.msra.mxu0 %v495
    %695 = vmatprep.subr.bf16.mxu0 %v494
    %696 = vmatpush1.bf16.msra.mxu0 %v493
    %697 = vmatprep.subr.bf16.mxu0 %v492
    %698 = vmatpush1.bf16.msra.mxu0 %v491
    %699 = vmatprep.subr.bf16.mxu0 %v522
    %700 = vmatpush2.bf16.msra.mxu0 %v521
    %701 = vmatprep.subr.bf16.mxu0 %v520
    %702 = vmatpush2.bf16.msra.mxu0 %v519
    %703 = vmatprep.subr.bf16.mxu0 %v518
    %704 = vmatpush2.bf16.msra.mxu0 %v517
    %705 = vmatprep.subr.bf16.mxu0 %v516
    %706 = vmatpush2.bf16.msra.mxu0 %v515
    %707 = vmatprep.subr.bf16.mxu0 %v514
    %708 = vmatpush2.bf16.msra.mxu0 %v513
    %709 = vmatprep.subr.bf16.mxu0 %v512
    %710 = vmatpush2.bf16.msra.mxu0 %v511
    %711 = vmatprep.subr.bf16.mxu0 %v510
    %712 = vmatpush2.bf16.msra.mxu0 %v509
    %713 = vmatprep.subr.bf16.mxu0 %v508
    %714 = vmatpush2.bf16.msra.mxu0 %v507
    %715 = vmatprep.mubr.bf16.mxu0 %v96
    %716 = vmatmul.mubr.bf16.gmra.mxu0 %v95
    %v717 = vpop.f32.mrf.mxu0
    %v718 = vadd.f32 0.0, %v717
    %v719 = vpop.f32.mrf.mxu0
    %v720 = vadd.f32 0.0, %v719
    %v721 = vpop.f32.mrf.mxu0
    %v722 = vadd.f32 0.0, %v721
    %v723 = vpop.f32.mrf.mxu0
    %v724 = vadd.f32 0.0, %v723
    %725 = vmatprep.mubr.bf16.mxu0 %v102
    %726 = vmatmul.mubr.bf16.gmra.mxu0 %v101
    %v727 = vpop.f32.mrf.mxu0
    %v728 = vadd.f32 0.0, %v727
    %v729 = vpop.f32.mrf.mxu0
    %v730 = vadd.f32 0.0, %v729
    %v731 = vpop.f32.mrf.mxu0
    %v732 = vadd.f32 0.0, %v731
    %v733 = vpop.f32.mrf.mxu0
    %v734 = vadd.f32 0.0, %v733
    %735 = vdwg.mxu0
    %736 = vmatprep.subr.bf16.mxu0 %v538
    %737 = vmatpush1.bf16.msra.mxu0 %v537
    %738 = vmatprep.subr.bf16.mxu0 %v536
    %739 = vmatpush1.bf16.msra.mxu0 %v535
    %740 = vmatprep.subr.bf16.mxu0 %v534
    %741 = vmatpush1.bf16.msra.mxu0 %v533
    %742 = vmatprep.subr.bf16.mxu0 %v532
    %743 = vmatpush1.bf16.msra.mxu0 %v531
    %744 = vmatprep.subr.bf16.mxu0 %v530
    %745 = vmatpush1.bf16.msra.mxu0 %v529
    %746 = vmatprep.subr.bf16.mxu0 %v528
    %747 = vmatpush1.bf16.msra.mxu0 %v527
    %748 = vmatprep.subr.bf16.mxu0 %v526
    %749 = vmatpush1.bf16.msra.mxu0 %v525
    %750 = vmatprep.subr.bf16.mxu0 %v524
    %751 = vmatpush1.bf16.msra.mxu0 %v523
    %752 = vmatprep.subr.bf16.mxu0 %v554
    %753 = vmatpush2.bf16.msra.mxu0 %v553
    %754 = vmatprep.subr.bf16.mxu0 %v552
    %755 = vmatpush2.bf16.msra.mxu0 %v551
    %756 = vmatprep.subr.bf16.mxu0 %v550
    %757 = vmatpush2.bf16.msra.mxu0 %v549
    %758 = vmatprep.subr.bf16.mxu0 %v548
    %759 = vmatpush2.bf16.msra.mxu0 %v547
    %760 = vmatprep.subr.bf16.mxu0 %v546
    %761 = vmatpush2.bf16.msra.mxu0 %v545
    %762 = vmatprep.subr.bf16.mxu0 %v544
    %763 = vmatpush2.bf16.msra.mxu0 %v543
    %764 = vmatprep.subr.bf16.mxu0 %v542
    %765 = vmatpush2.bf16.msra.mxu0 %v541
    %766 = vmatprep.subr.bf16.mxu0 %v540
    %767 = vmatpush2.bf16.msra.mxu0 %v539
    %768 = vmatprep.mubr.bf16.mxu0 %v98
    %769 = vmatmul.mubr.bf16.gmra.mxu0 %v97
    %v770 = vpop.f32.mrf.mxu0
    %v771 = vadd.f32 %v718, %v770
    %v772 = vpop.f32.mrf.mxu0
    %v773 = vadd.f32 %v720, %v772
    %v774 = vpop.f32.mrf.mxu0
    %v775 = vadd.f32 %v722, %v774
    %v776 = vpop.f32.mrf.mxu0
    %v777 = vadd.f32 %v724, %v776
    %778 = vmatprep.mubr.bf16.mxu0 %v104
    %779 = vmatmul.mubr.bf16.gmra.mxu0 %v103
    %v780 = vpop.f32.mrf.mxu0
    %v781 = vadd.f32 %v728, %v780
    %v782 = vpop.f32.mrf.mxu0
    %v783 = vadd.f32 %v730, %v782
    %v784 = vpop.f32.mrf.mxu0
    %v785 = vadd.f32 %v732, %v784
    %v786 = vpop.f32.mrf.mxu0
    %v787 = vadd.f32 %v734, %v786
    %788 = vdwg.mxu0
    %789 = vmatprep.subr.bf16.mxu0 %v570
    %790 = vmatpush1.bf16.msra.mxu0 %v569
    %791 = vmatprep.subr.bf16.mxu0 %v568
    %792 = vmatpush1.bf16.msra.mxu0 %v567
    %793 = vmatprep.subr.bf16.mxu0 %v566
    %794 = vmatpush1.bf16.msra.mxu0 %v565
    %795 = vmatprep.subr.bf16.mxu0 %v564
    %796 = vmatpush1.bf16.msra.mxu0 %v563
    %797 = vmatprep.subr.bf16.mxu0 %v562
    %798 = vmatpush1.bf16.msra.mxu0 %v561
    %799 = vmatprep.subr.bf16.mxu0 %v560
    %800 = vmatpush1.bf16.msra.mxu0 %v559
    %801 = vmatprep.subr.bf16.mxu0 %v558
    %802 = vmatpush1.bf16.msra.mxu0 %v557
    %803 = vmatprep.subr.bf16.mxu0 %v556
    %804 = vmatpush1.bf16.msra.mxu0 %v555
    %805 = vmatprep.subr.bf16.mxu0 %v586
    %806 = vmatpush2.bf16.msra.mxu0 %v585
    %807 = vmatprep.subr.bf16.mxu0 %v584
    %808 = vmatpush2.bf16.msra.mxu0 %v583
    %809 = vmatprep.subr.bf16.mxu0 %v582
    %810 = vmatpush2.bf16.msra.mxu0 %v581
    %811 = vmatprep.subr.bf16.mxu0 %v580
    %812 = vmatpush2.bf16.msra.mxu0 %v579
    %813 = vmatprep.subr.bf16.mxu0 %v578
    %814 = vmatpush2.bf16.msra.mxu0 %v577
    %815 = vmatprep.subr.bf16.mxu0 %v576
    %816 = vmatpush2.bf16.msra.mxu0 %v575
    %817 = vmatprep.subr.bf16.mxu0 %v574
    %818 = vmatpush2.bf16.msra.mxu0 %v573
    %819 = vmatprep.subr.bf16.mxu0 %v572
    %820 = vmatpush2.bf16.msra.mxu0 %v571
    %821 = vmatprep.mubr.bf16.mxu0 %v100
    %822 = vmatmul.mubr.bf16.gmra.mxu0 %v99
    %v823 = vpop.f32.mrf.mxu0
    %v824 = vadd.f32 %v771, %v823
    %v825 = vpop.f32.mrf.mxu0
    %v826 = vadd.f32 %v773, %v825
    %v827 = vpop.f32.mrf.mxu0
    %v828 = vadd.f32 %v775, %v827
    %v829 = vpop.f32.mrf.mxu0
    %v830 = vadd.f32 %v777, %v829
    %831 = vmatprep.mubr.bf16.mxu0 %v106
    %832 = vmatmul.mubr.bf16.gmra.mxu0 %v105
    %v833 = vpop.f32.mrf.mxu0
    %v834 = vadd.f32 %v781, %v833
    %v835 = vpop.f32.mrf.mxu0
    %v836 = vadd.f32 %v783, %v835
    %v837 = vpop.f32.mrf.mxu0
    %v838 = vadd.f32 %v785, %v837
    %v839 = vpop.f32.mrf.mxu0
    %v840 = vadd.f32 %v787, %v839
    %841 = vdwg.mxu0
    %v842 = vrot.slane %v826, 1
    %v843 = vrot.slane %v830, 1
    %v844 = vrot.slane %v836, 1
    %v845 = vrot.slane %v840, 1
    %v846 = vlaneseq
    %v847 = vshrl.u32 %v846, 7
    %vm848 = vcmp.lt.s32.totalorder %v847, 7
    %v849 = vsel %vm848, %v844, %v845
    %v850 = vsel %vm848, %v843, %v844
    %v851 = vsel %vm848, %v842, %v843
    %v852 = vsel %vm848, %v845, %v842
    %v853 = vadd.f32 %v824, %v851
    %v854 = vadd.f32 %v828, %v850
    %v855 = vadd.f32 %v834, %v849
    %v856 = vadd.f32 %v838, %v852
    %s857 = scalar_lea.vmem [#allocation5], 768
    %v858 = vld [vmem:[%s857] sm:$0xff]
    %v859 = vld [vmem:[%s857 + $0x8] sm:$0xff]
    %v860 = vld [vmem:[%s857 + $0x10] sm:$0xff]
    %v861 = vld [vmem:[%s857 + $0x18] sm:$0xff]
    %v862 = vld [vmem:[%s857 + $0x20] sm:$0xff]
    %v863 = vld [vmem:[%s857 + $0x28] sm:$0xff]
    %v864 = vld [vmem:[%s857 + $0x30] sm:$0xff]
    %v865 = vld [vmem:[%s857 + $0x38] sm:$0xff]
    %v866 = vld [vmem:[%s857 + $0x40] sm:$0xff]
    %v867 = vld [vmem:[%s857 + $0x48] sm:$0xff]
    %v868 = vld [vmem:[%s857 + $0x50] sm:$0xff]
    %v869 = vld [vmem:[%s857 + $0x58] sm:$0xff]
    %v870 = vld [vmem:[%s857 + $0x60] sm:$0xff]
    %v871 = vld [vmem:[%s857 + $0x68] sm:$0xff]
    %v872 = vld [vmem:[%s857 + $0x70] sm:$0xff]
    %v873 = vld [vmem:[%s857 + $0x78] sm:$0xff]
    %v874 = vld [vmem:[%s857 + $0x80] sm:$0xff]
    %v875 = vld [vmem:[%s857 + $0x88] sm:$0xff]
    %v876 = vld [vmem:[%s857 + $0x90] sm:$0xff]
    %v877 = vld [vmem:[%s857 + $0x98] sm:$0xff]
    %v878 = vld [vmem:[%s857 + $0xa0] sm:$0xff]
    %v879 = vld [vmem:[%s857 + $0xa8] sm:$0xff]
    %v880 = vld [vmem:[%s857 + $0xb0] sm:$0xff]
    %v881 = vld [vmem:[%s857 + $0xb8] sm:$0xff]
    %v882 = vld [vmem:[%s857 + $0xc0] sm:$0xff]
    %v883 = vld [vmem:[%s857 + $0xc8] sm:$0xff]
    %v884 = vld [vmem:[%s857 + $0xd0] sm:$0xff]
    %v885 = vld [vmem:[%s857 + $0xd8] sm:$0xff]
    %v886 = vld [vmem:[%s857 + $0xe0] sm:$0xff]
    %v887 = vld [vmem:[%s857 + $0xe8] sm:$0xff]
    %v888 = vld [vmem:[%s857 + $0xf0] sm:$0xff]
    %v889 = vld [vmem:[%s857 + $0xf8] sm:$0xff]
    %v890 = vld [vmem:[%s857 + $0x100] sm:$0xff]
    %v891 = vld [vmem:[%s857 + $0x108] sm:$0xff]
    %v892 = vld [vmem:[%s857 + $0x110] sm:$0xff]
    %v893 = vld [vmem:[%s857 + $0x118] sm:$0xff]
    %v894 = vld [vmem:[%s857 + $0x120] sm:$0xff]
    %v895 = vld [vmem:[%s857 + $0x128] sm:$0xff]
    %v896 = vld [vmem:[%s857 + $0x130] sm:$0xff]
    %v897 = vld [vmem:[%s857 + $0x138] sm:$0xff]
    %v898 = vld [vmem:[%s857 + $0x140] sm:$0xff]
    %v899 = vld [vmem:[%s857 + $0x148] sm:$0xff]
    %v900 = vld [vmem:[%s857 + $0x150] sm:$0xff]
    %v901 = vld [vmem:[%s857 + $0x158] sm:$0xff]
    %v902 = vld [vmem:[%s857 + $0x160] sm:$0xff]
    %v903 = vld [vmem:[%s857 + $0x168] sm:$0xff]
    %v904 = vld [vmem:[%s857 + $0x170] sm:$0xff]
    %v905 = vld [vmem:[%s857 + $0x178] sm:$0xff]
    %v906 = vld [vmem:[%s857 + $0x180] sm:$0xff]
    %v907 = vld [vmem:[%s857 + $0x188] sm:$0xff]
    %v908 = vld [vmem:[%s857 + $0x190] sm:$0xff]
    %v909 = vld [vmem:[%s857 + $0x198] sm:$0xff]
    %v910 = vld [vmem:[%s857 + $0x1a0] sm:$0xff]
    %v911 = vld [vmem:[%s857 + $0x1a8] sm:$0xff]
    %v912 = vld [vmem:[%s857 + $0x1b0] sm:$0xff]
    %v913 = vld [vmem:[%s857 + $0x1b8] sm:$0xff]
    %v914 = vld [vmem:[%s857 + $0x1c0] sm:$0xff]
    %v915 = vld [vmem:[%s857 + $0x1c8] sm:$0xff]
    %v916 = vld [vmem:[%s857 + $0x1d0] sm:$0xff]
    %v917 = vld [vmem:[%s857 + $0x1d8] sm:$0xff]
    %v918 = vld [vmem:[%s857 + $0x1e0] sm:$0xff]
    %v919 = vld [vmem:[%s857 + $0x1e8] sm:$0xff]
    %v920 = vld [vmem:[%s857 + $0x1f0] sm:$0xff]
    %v921 = vld [vmem:[%s857 + $0x1f8] sm:$0xff]
    %v922 = vld [vmem:[%s857 + $0x200] sm:$0xff]
    %v923 = vld [vmem:[%s857 + $0x208] sm:$0xff]
    %v924 = vld [vmem:[%s857 + $0x210] sm:$0xff]
    %v925 = vld [vmem:[%s857 + $0x218] sm:$0xff]
    %v926 = vld [vmem:[%s857 + $0x220] sm:$0xff]
    %v927 = vld [vmem:[%s857 + $0x228] sm:$0xff]
    %v928 = vld [vmem:[%s857 + $0x230] sm:$0xff]
    %v929 = vld [vmem:[%s857 + $0x238] sm:$0xff]
    %v930 = vld [vmem:[%s857 + $0x240] sm:$0xff]
    %v931 = vld [vmem:[%s857 + $0x248] sm:$0xff]
    %v932 = vld [vmem:[%s857 + $0x250] sm:$0xff]
    %v933 = vld [vmem:[%s857 + $0x258] sm:$0xff]
    %v934 = vld [vmem:[%s857 + $0x260] sm:$0xff]
    %v935 = vld [vmem:[%s857 + $0x268] sm:$0xff]
    %v936 = vld [vmem:[%s857 + $0x270] sm:$0xff]
    %v937 = vld [vmem:[%s857 + $0x278] sm:$0xff]
    %v938 = vld [vmem:[%s857 + $0x280] sm:$0xff]
    %v939 = vld [vmem:[%s857 + $0x288] sm:$0xff]
    %v940 = vld [vmem:[%s857 + $0x290] sm:$0xff]
    %v941 = vld [vmem:[%s857 + $0x298] sm:$0xff]
    %v942 = vld [vmem:[%s857 + $0x2a0] sm:$0xff]
    %v943 = vld [vmem:[%s857 + $0x2a8] sm:$0xff]
    %v944 = vld [vmem:[%s857 + $0x2b0] sm:$0xff]
    %v945 = vld [vmem:[%s857 + $0x2b8] sm:$0xff]
    %v946 = vld [vmem:[%s857 + $0x2c0] sm:$0xff]
    %v947 = vld [vmem:[%s857 + $0x2c8] sm:$0xff]
    %v948 = vld [vmem:[%s857 + $0x2d0] sm:$0xff]
    %v949 = vld [vmem:[%s857 + $0x2d8] sm:$0xff]
    %v950 = vld [vmem:[%s857 + $0x2e0] sm:$0xff]
    %v951 = vld [vmem:[%s857 + $0x2e8] sm:$0xff]
    %v952 = vld [vmem:[%s857 + $0x2f0] sm:$0xff]
    %v953 = vld [vmem:[%s857 + $0x2f8] sm:$0xff]
    %v1050 = vunpack.c.l.b16 %v858
    %v1051 = vunpack.c.h.b16 %v858
    %v1052 = vunpack.c.l.b16 %v859
    %v1053 = vunpack.c.h.b16 %v859
    %v1054 = vunpack.c.l.b16 %v860
    %v1055 = vunpack.c.h.b16 %v860
    %v1056 = vunpack.c.l.b16 %v861
    %v1057 = vunpack.c.h.b16 %v861
    %v1058 = vunpack.c.l.b16 %v862
    %v1059 = vunpack.c.h.b16 %v862
    %v1060 = vunpack.c.l.b16 %v863
    %v1061 = vunpack.c.h.b16 %v863
    %v1062 = vunpack.c.l.b16 %v864
    %v1063 = vunpack.c.h.b16 %v864
    %v1064 = vunpack.c.l.b16 %v865
    %v1065 = vunpack.c.h.b16 %v865
    %v1066 = vunpack.c.l.b16 %v866
    %v1067 = vunpack.c.h.b16 %v866
    %v1068 = vunpack.c.l.b16 %v867
    %v1069 = vunpack.c.h.b16 %v867
    %v1070 = vunpack.c.l.b16 %v868
    %v1071 = vunpack.c.h.b16 %v868
    %v1072 = vunpack.c.l.b16 %v869
    %v1073 = vunpack.c.h.b16 %v869
    %v1074 = vunpack.c.l.b16 %v870
    %v1075 = vunpack.c.h.b16 %v870
    %v1076 = vunpack.c.l.b16 %v871
    %v1077 = vunpack.c.h.b16 %v871
    %v1078 = vunpack.c.l.b16 %v872
    %v1079 = vunpack.c.h.b16 %v872
    %v1080 = vunpack.c.l.b16 %v873
    %v1081 = vunpack.c.h.b16 %v873
    %v1082 = vunpack.c.l.b16 %v874
    %v1083 = vunpack.c.h.b16 %v874
    %v1084 = vunpack.c.l.b16 %v875
    %v1085 = vunpack.c.h.b16 %v875
    %v1086 = vunpack.c.l.b16 %v876
    %v1087 = vunpack.c.h.b16 %v876
    %v1088 = vunpack.c.l.b16 %v877
    %v1089 = vunpack.c.h.b16 %v877
    %v1090 = vunpack.c.l.b16 %v878
    %v1091 = vunpack.c.h.b16 %v878
    %v1092 = vunpack.c.l.b16 %v879
    %v1093 = vunpack.c.h.b16 %v879
    %v1094 = vunpack.c.l.b16 %v880
    %v1095 = vunpack.c.h.b16 %v880
    %v1096 = vunpack.c.l.b16 %v881
    %v1097 = vunpack.c.h.b16 %v881
    %v1098 = vunpack.c.l.b16 %v882
    %v1099 = vunpack.c.h.b16 %v882
    %v1100 = vunpack.c.l.b16 %v883
    %v1101 = vunpack.c.h.b16 %v883
    %v1102 = vunpack.c.l.b16 %v884
    %v1103 = vunpack.c.h.b16 %v884
    %v1104 = vunpack.c.l.b16 %v885
    %v1105 = vunpack.c.h.b16 %v885
    %v1106 = vunpack.c.l.b16 %v886
    %v1107 = vunpack.c.h.b16 %v886
    %v1108 = vunpack.c.l.b16 %v887
    %v1109 = vunpack.c.h.b16 %v887
    %v1110 = vunpack.c.l.b16 %v888
    %v1111 = vunpack.c.h.b16 %v888
    %v1112 = vunpack.c.l.b16 %v889
    %v1113 = vunpack.c.h.b16 %v889
    %v1114 = vunpack.c.l.b16 %v890
    %v1115 = vunpack.c.h.b16 %v890
    %v1116 = vunpack.c.l.b16 %v891
    %v1117 = vunpack.c.h.b16 %v891
    %v1118 = vunpack.c.l.b16 %v892
    %v1119 = vunpack.c.h.b16 %v892
    %v1120 = vunpack.c.l.b16 %v893
    %v1121 = vunpack.c.h.b16 %v893
    %v1122 = vunpack.c.l.b16 %v894
    %v1123 = vunpack.c.h.b16 %v894
    %v1124 = vunpack.c.l.b16 %v895
    %v1125 = vunpack.c.h.b16 %v895
    %v1126 = vunpack.c.l.b16 %v896
    %v1127 = vunpack.c.h.b16 %v896
    %v1128 = vunpack.c.l.b16 %v897
    %v1129 = vunpack.c.h.b16 %v897
    %v1130 = vunpack.c.l.b16 %v898
    %v1131 = vunpack.c.h.b16 %v898
    %v1132 = vunpack.c.l.b16 %v899
    %v1133 = vunpack.c.h.b16 %v899
    %v1134 = vunpack.c.l.b16 %v900
    %v1135 = vunpack.c.h.b16 %v900
    %v1136 = vunpack.c.l.b16 %v901
    %v1137 = vunpack.c.h.b16 %v901
    %v1138 = vunpack.c.l.b16 %v902
    %v1139 = vunpack.c.h.b16 %v902
    %v1140 = vunpack.c.l.b16 %v903
    %v1141 = vunpack.c.h.b16 %v903
    %v1142 = vunpack.c.l.b16 %v904
    %v1143 = vunpack.c.h.b16 %v904
    %v1144 = vunpack.c.l.b16 %v905
    %v1145 = vunpack.c.h.b16 %v905
    %v1146 = vunpack.c.l.b16 %v906
    %v1147 = vunpack.c.h.b16 %v906
    %v1148 = vunpack.c.l.b16 %v907
    %v1149 = vunpack.c.h.b16 %v907
    %v1150 = vunpack.c.l.b16 %v908
    %v1151 = vunpack.c.h.b16 %v908
    %v1152 = vunpack.c.l.b16 %v909
    %v1153 = vunpack.c.h.b16 %v909
    %v1154 = vunpack.c.l.b16 %v910
    %v1155 = vunpack.c.h.b16 %v910
    %v1156 = vunpack.c.l.b16 %v911
    %v1157 = vunpack.c.h.b16 %v911
    %v1158 = vunpack.c.l.b16 %v912
    %v1159 = vunpack.c.h.b16 %v912
    %v1160 = vunpack.c.l.b16 %v913
    %v1161 = vunpack.c.h.b16 %v913
    %v1162 = vunpack.c.l.b16 %v914
    %v1163 = vunpack.c.h.b16 %v914
    %v1164 = vunpack.c.l.b16 %v915
    %v1165 = vunpack.c.h.b16 %v915
    %v1166 = vunpack.c.l.b16 %v916
    %v1167 = vunpack.c.h.b16 %v916
    %v1168 = vunpack.c.l.b16 %v917
    %v1169 = vunpack.c.h.b16 %v917
    %v1170 = vunpack.c.l.b16 %v918
    %v1171 = vunpack.c.h.b16 %v918
    %v1172 = vunpack.c.l.b16 %v919
    %v1173 = vunpack.c.h.b16 %v919
    %v1174 = vunpack.c.l.b16 %v920
    %v1175 = vunpack.c.h.b16 %v920
    %v1176 = vunpack.c.l.b16 %v921
    %v1177 = vunpack.c.h.b16 %v921
    %v1178 = vunpack.c.l.b16 %v922
    %v1179 = vunpack.c.h.b16 %v922
    %v1180 = vunpack.c.l.b16 %v923
    %v1181 = vunpack.c.h.b16 %v923
    %v1182 = vunpack.c.l.b16 %v924
    %v1183 = vunpack.c.h.b16 %v924
    %v1184 = vunpack.c.l.b16 %v925
    %v1185 = vunpack.c.h.b16 %v925
    %v1186 = vunpack.c.l.b16 %v926
    %v1187 = vunpack.c.h.b16 %v926
    %v1188 = vunpack.c.l.b16 %v927
    %v1189 = vunpack.c.h.b16 %v927
    %v1190 = vunpack.c.l.b16 %v928
    %v1191 = vunpack.c.h.b16 %v928
    %v1192 = vunpack.c.l.b16 %v929
    %v1193 = vunpack.c.h.b16 %v929
    %v1194 = vunpack.c.l.b16 %v930
    %v1195 = vunpack.c.h.b16 %v930
    %v1196 = vunpack.c.l.b16 %v931
    %v1197 = vunpack.c.h.b16 %v931
    %v1198 = vunpack.c.l.b16 %v932
    %v1199 = vunpack.c.h.b16 %v932
    %v1200 = vunpack.c.l.b16 %v933
    %v1201 = vunpack.c.h.b16 %v933
    %v1202 = vunpack.c.l.b16 %v934
    %v1203 = vunpack.c.h.b16 %v934
    %v1204 = vunpack.c.l.b16 %v935
    %v1205 = vunpack.c.h.b16 %v935
    %v1206 = vunpack.c.l.b16 %v936
    %v1207 = vunpack.c.h.b16 %v936
    %v1208 = vunpack.c.l.b16 %v937
    %v1209 = vunpack.c.h.b16 %v937
    %v1210 = vunpack.c.l.b16 %v938
    %v1211 = vunpack.c.h.b16 %v938
    %v1212 = vunpack.c.l.b16 %v939
    %v1213 = vunpack.c.h.b16 %v939
    %v1214 = vunpack.c.l.b16 %v940
    %v1215 = vunpack.c.h.b16 %v940
    %v1216 = vunpack.c.l.b16 %v941
    %v1217 = vunpack.c.h.b16 %v941
    %v1218 = vunpack.c.l.b16 %v942
    %v1219 = vunpack.c.h.b16 %v942
    %v1220 = vunpack.c.l.b16 %v943
    %v1221 = vunpack.c.h.b16 %v943
    %v1222 = vunpack.c.l.b16 %v944
    %v1223 = vunpack.c.h.b16 %v944
    %v1224 = vunpack.c.l.b16 %v945
    %v1225 = vunpack.c.h.b16 %v945
    %v1226 = vunpack.c.l.b16 %v946
    %v1227 = vunpack.c.h.b16 %v946
    %v1228 = vunpack.c.l.b16 %v947
    %v1229 = vunpack.c.h.b16 %v947
    %v1230 = vunpack.c.l.b16 %v948
    %v1231 = vunpack.c.h.b16 %v948
    %v1232 = vunpack.c.l.b16 %v949
    %v1233 = vunpack.c.h.b16 %v949
    %v1234 = vunpack.c.l.b16 %v950
    %v1235 = vunpack.c.h.b16 %v950
    %v1236 = vunpack.c.l.b16 %v951
    %v1237 = vunpack.c.h.b16 %v951
    %v1238 = vunpack.c.l.b16 %v952
    %v1239 = vunpack.c.h.b16 %v952
    %v1240 = vunpack.c.l.b16 %v953
    %v1241 = vunpack.c.h.b16 %v953
    %v1242 = vpack.c.b16 %v1052, %v1050
    %v1243 = vpack.c.b16 %v1053, %v1051
    %v1244 = vpack.c.b16 %v1056, %v1054
    %v1245 = vpack.c.b16 %v1057, %v1055
    %v1246 = vpack.c.b16 %v1060, %v1058
    %v1247 = vpack.c.b16 %v1061, %v1059
    %v1248 = vpack.c.b16 %v1064, %v1062
    %v1249 = vpack.c.b16 %v1065, %v1063
    %v1250 = vpack.c.b16 %v1068, %v1066
    %v1251 = vpack.c.b16 %v1069, %v1067
    %v1252 = vpack.c.b16 %v1072, %v1070
    %v1253 = vpack.c.b16 %v1073, %v1071
    %v1254 = vpack.c.b16 %v1076, %v1074
    %v1255 = vpack.c.b16 %v1077, %v1075
    %v1256 = vpack.c.b16 %v1080, %v1078
    %v1257 = vpack.c.b16 %v1081, %v1079
    %v1258 = vpack.c.b16 %v1084, %v1082
    %v1259 = vpack.c.b16 %v1085, %v1083
    %v1260 = vpack.c.b16 %v1088, %v1086
    %v1261 = vpack.c.b16 %v1089, %v1087
    %v1262 = vpack.c.b16 %v1092, %v1090
    %v1263 = vpack.c.b16 %v1093, %v1091
    %v1264 = vpack.c.b16 %v1096, %v1094
    %v1265 = vpack.c.b16 %v1097, %v1095
    %v1266 = vpack.c.b16 %v1100, %v1098
    %v1267 = vpack.c.b16 %v1101, %v1099
    %v1268 = vpack.c.b16 %v1104, %v1102
    %v1269 = vpack.c.b16 %v1105, %v1103
    %v1270 = vpack.c.b16 %v1108, %v1106
    %v1271 = vpack.c.b16 %v1109, %v1107
    %v1272 = vpack.c.b16 %v1112, %v1110
    %v1273 = vpack.c.b16 %v1113, %v1111
    %v1274 = vpack.c.b16 %v1116, %v1114
    %v1275 = vpack.c.b16 %v1117, %v1115
    %v1276 = vpack.c.b16 %v1120, %v1118
    %v1277 = vpack.c.b16 %v1121, %v1119
    %v1278 = vpack.c.b16 %v1124, %v1122
    %v1279 = vpack.c.b16 %v1125, %v1123
    %v1280 = vpack.c.b16 %v1128, %v1126
    %v1281 = vpack.c.b16 %v1129, %v1127
    %v1282 = vpack.c.b16 %v1132, %v1130
    %v1283 = vpack.c.b16 %v1133, %v1131
    %v1284 = vpack.c.b16 %v1136, %v1134
    %v1285 = vpack.c.b16 %v1137, %v1135
    %v1286 = vpack.c.b16 %v1140, %v1138
    %v1287 = vpack.c.b16 %v1141, %v1139
    %v1288 = vpack.c.b16 %v1144, %v1142
    %v1289 = vpack.c.b16 %v1145, %v1143
    %v1290 = vpack.c.b16 %v1148, %v1146
    %v1291 = vpack.c.b16 %v1149, %v1147
    %v1292 = vpack.c.b16 %v1152, %v1150
    %v1293 = vpack.c.b16 %v1153, %v1151
    %v1294 = vpack.c.b16 %v1156, %v1154
    %v1295 = vpack.c.b16 %v1157, %v1155
    %v1296 = vpack.c.b16 %v1160, %v1158
    %v1297 = vpack.c.b16 %v1161, %v1159
    %v1298 = vpack.c.b16 %v1164, %v1162
    %v1299 = vpack.c.b16 %v1165, %v1163
    %v1300 = vpack.c.b16 %v1168, %v1166
    %v1301 = vpack.c.b16 %v1169, %v1167
    %v1302 = vpack.c.b16 %v1172, %v1170
    %v1303 = vpack.c.b16 %v1173, %v1171
    %v1304 = vpack.c.b16 %v1176, %v1174
    %v1305 = vpack.c.b16 %v1177, %v1175
    %v1306 = vpack.c.b16 %v1180, %v1178
    %v1307 = vpack.c.b16 %v1181, %v1179
    %v1308 = vpack.c.b16 %v1184, %v1182
    %v1309 = vpack.c.b16 %v1185, %v1183
    %v1310 = vpack.c.b16 %v1188, %v1186
    %v1311 = vpack.c.b16 %v1189, %v1187
    %v1312 = vpack.c.b16 %v1192, %v1190
    %v1313 = vpack.c.b16 %v1193, %v1191
    %v1314 = vpack.c.b16 %v1196, %v1194
    %v1315 = vpack.c.b16 %v1197, %v1195
    %v1316 = vpack.c.b16 %v1200, %v1198
    %v1317 = vpack.c.b16 %v1201, %v1199
    %v1318 = vpack.c.b16 %v1204, %v1202
    %v1319 = vpack.c.b16 %v1205, %v1203
    %v1320 = vpack.c.b16 %v1208, %v1206
    %v1321 = vpack.c.b16 %v1209, %v1207
    %v1322 = vpack.c.b16 %v1212, %v1210
    %v1323 = vpack.c.b16 %v1213, %v1211
    %v1324 = vpack.c.b16 %v1216, %v1214
    %v1325 = vpack.c.b16 %v1217, %v1215
    %v1326 = vpack.c.b16 %v1220, %v1218
    %v1327 = vpack.c.b16 %v1221, %v1219
    %v1328 = vpack.c.b16 %v1224, %v1222
    %v1329 = vpack.c.b16 %v1225, %v1223
    %v1330 = vpack.c.b16 %v1228, %v1226
    %v1331 = vpack.c.b16 %v1229, %v1227
    %v1332 = vpack.c.b16 %v1232, %v1230
    %v1333 = vpack.c.b16 %v1233, %v1231
    %v1334 = vpack.c.b16 %v1236, %v1234
    %v1335 = vpack.c.b16 %v1237, %v1235
    %v1336 = vpack.c.b16 %v1240, %v1238
    %v1337 = vpack.c.b16 %v1241, %v1239
    %1434 = vmatprep.subr.bf16.mxu0 %v1257
    %1435 = vmatpush1.bf16.msra.mxu0 %v1256
    %1436 = vmatprep.subr.bf16.mxu0 %v1255
    %1437 = vmatpush1.bf16.msra.mxu0 %v1254
    %1438 = vmatprep.subr.bf16.mxu0 %v1253
    %1439 = vmatpush1.bf16.msra.mxu0 %v1252
    %1440 = vmatprep.subr.bf16.mxu0 %v1251
    %1441 = vmatpush1.bf16.msra.mxu0 %v1250
    %1442 = vmatprep.subr.bf16.mxu0 %v1249
    %1443 = vmatpush1.bf16.msra.mxu0 %v1248
    %1444 = vmatprep.subr.bf16.mxu0 %v1247
    %1445 = vmatpush1.bf16.msra.mxu0 %v1246
    %1446 = vmatprep.subr.bf16.mxu0 %v1245
    %1447 = vmatpush1.bf16.msra.mxu0 %v1244
    %1448 = vmatprep.subr.bf16.mxu0 %v1243
    %1449 = vmatpush1.bf16.msra.mxu0 %v1242
    %1450 = vmatprep.subr.bf16.mxu0 %v1273
    %1451 = vmatpush2.bf16.msra.mxu0 %v1272
    %1452 = vmatprep.subr.bf16.mxu0 %v1271
    %1453 = vmatpush2.bf16.msra.mxu0 %v1270
    %1454 = vmatprep.subr.bf16.mxu0 %v1269
    %1455 = vmatpush2.bf16.msra.mxu0 %v1268
    %1456 = vmatprep.subr.bf16.mxu0 %v1267
    %1457 = vmatpush2.bf16.msra.mxu0 %v1266
    %1458 = vmatprep.subr.bf16.mxu0 %v1265
    %1459 = vmatpush2.bf16.msra.mxu0 %v1264
    %1460 = vmatprep.subr.bf16.mxu0 %v1263
    %1461 = vmatpush2.bf16.msra.mxu0 %v1262
    %1462 = vmatprep.subr.bf16.mxu0 %v1261
    %1463 = vmatpush2.bf16.msra.mxu0 %v1260
    %1464 = vmatprep.subr.bf16.mxu0 %v1259
    %1465 = vmatpush2.bf16.msra.mxu0 %v1258
    %1466 = vmatprep.mubr.bf16.mxu0 %v96
    %1467 = vmatmul.mubr.bf16.gmra.mxu0 %v95
    %v1468 = vpop.f32.mrf.mxu0
    %v1469 = vadd.f32 0.0, %v1468
    %v1470 = vpop.f32.mrf.mxu0
    %v1471 = vadd.f32 0.0, %v1470
    %v1472 = vpop.f32.mrf.mxu0
    %v1473 = vadd.f32 0.0, %v1472
    %v1474 = vpop.f32.mrf.mxu0
    %v1475 = vadd.f32 0.0, %v1474
    %1476 = vmatprep.mubr.bf16.mxu0 %v102
    %1477 = vmatmul.mubr.bf16.gmra.mxu0 %v101
    %v1478 = vpop.f32.mrf.mxu0
    %v1479 = vadd.f32 0.0, %v1478
    %v1480 = vpop.f32.mrf.mxu0
    %v1481 = vadd.f32 0.0, %v1480
    %v1482 = vpop.f32.mrf.mxu0
    %v1483 = vadd.f32 0.0, %v1482
    %v1484 = vpop.f32.mrf.mxu0
    %v1485 = vadd.f32 0.0, %v1484
    %1486 = vdwg.mxu0
    %1487 = vmatprep.subr.bf16.mxu0 %v1289
    %1488 = vmatpush1.bf16.msra.mxu0 %v1288
    %1489 = vmatprep.subr.bf16.mxu0 %v1287
    %1490 = vmatpush1.bf16.msra.mxu0 %v1286
    %1491 = vmatprep.subr.bf16.mxu0 %v1285
    %1492 = vmatpush1.bf16.msra.mxu0 %v1284
    %1493 = vmatprep.subr.bf16.mxu0 %v1283
    %1494 = vmatpush1.bf16.msra.mxu0 %v1282
    %1495 = vmatprep.subr.bf16.mxu0 %v1281
    %1496 = vmatpush1.bf16.msra.mxu0 %v1280
    %1497 = vmatprep.subr.bf16.mxu0 %v1279
    %1498 = vmatpush1.bf16.msra.mxu0 %v1278
    %1499 = vmatprep.subr.bf16.mxu0 %v1277
    %1500 = vmatpush1.bf16.msra.mxu0 %v1276
    %1501 = vmatprep.subr.bf16.mxu0 %v1275
    %1502 = vmatpush1.bf16.msra.mxu0 %v1274
    %1503 = vmatprep.subr.bf16.mxu0 %v1305
    %1504 = vmatpush2.bf16.msra.mxu0 %v1304
    %1505 = vmatprep.subr.bf16.mxu0 %v1303
    %1506 = vmatpush2.bf16.msra.mxu0 %v1302
    %1507 = vmatprep.subr.bf16.mxu0 %v1301
    %1508 = vmatpush2.bf16.msra.mxu0 %v1300
    %1509 = vmatprep.subr.bf16.mxu0 %v1299
    %1510 = vmatpush2.bf16.msra.mxu0 %v1298
    %1511 = vmatprep.subr.bf16.mxu0 %v1297
    %1512 = vmatpush2.bf16.msra.mxu0 %v1296
    %1513 = vmatprep.subr.bf16.mxu0 %v1295
    %1514 = vmatpush2.bf16.msra.mxu0 %v1294
    %1515 = vmatprep.subr.bf16.mxu0 %v1293
    %1516 = vmatpush2.bf16.msra.mxu0 %v1292
    %1517 = vmatprep.subr.bf16.mxu0 %v1291
    %1518 = vmatpush2.bf16.msra.mxu0 %v1290
    %1519 = vmatprep.mubr.bf16.mxu0 %v98
    %1520 = vmatmul.mubr.bf16.gmra.mxu0 %v97
    %v1521 = vpop.f32.mrf.mxu0
    %v1522 = vadd.f32 %v1469, %v1521
    %v1523 = vpop.f32.mrf.mxu0
    %v1524 = vadd.f32 %v1471, %v1523
    %v1525 = vpop.f32.mrf.mxu0
    %v1526 = vadd.f32 %v1473, %v1525
    %v1527 = vpop.f32.mrf.mxu0
    %v1528 = vadd.f32 %v1475, %v1527
    %1529 = vmatprep.mubr.bf16.mxu0 %v104
    %1530 = vmatmul.mubr.bf16.gmra.mxu0 %v103
    %v1531 = vpop.f32.mrf.mxu0
    %v1532 = vadd.f32 %v1479, %v1531
    %v1533 = vpop.f32.mrf.mxu0
    %v1534 = vadd.f32 %v1481, %v1533
    %v1535 = vpop.f32.mrf.mxu0
    %v1536 = vadd.f32 %v1483, %v1535
    %v1537 = vpop.f32.mrf.mxu0
    %v1538 = vadd.f32 %v1485, %v1537
    %1539 = vdwg.mxu0
    %1540 = vmatprep.subr.bf16.mxu0 %v1321
    %1541 = vmatpush1.bf16.msra.mxu0 %v1320
    %1542 = vmatprep.subr.bf16.mxu0 %v1319
    %1543 = vmatpush1.bf16.msra.mxu0 %v1318
    %1544 = vmatprep.subr.bf16.mxu0 %v1317
    %1545 = vmatpush1.bf16.msra.mxu0 %v1316
    %1546 = vmatprep.subr.bf16.mxu0 %v1315
    %1547 = vmatpush1.bf16.msra.mxu0 %v1314
    %1548 = vmatprep.subr.bf16.mxu0 %v1313
    %1549 = vmatpush1.bf16.msra.mxu0 %v1312
    %1550 = vmatprep.subr.bf16.mxu0 %v1311
    %1551 = vmatpush1.bf16.msra.mxu0 %v1310
    %1552 = vmatprep.subr.bf16.mxu0 %v1309
    %1553 = vmatpush1.bf16.msra.mxu0 %v1308
    %1554 = vmatprep.subr.bf16.mxu0 %v1307
    %1555 = vmatpush1.bf16.msra.mxu0 %v1306
    %1556 = vmatprep.subr.bf16.mxu0 %v1337
    %1557 = vmatpush2.bf16.msra.mxu0 %v1336
    %1558 = vmatprep.subr.bf16.mxu0 %v1335
    %1559 = vmatpush2.bf16.msra.mxu0 %v1334
    %1560 = vmatprep.subr.bf16.mxu0 %v1333
    %1561 = vmatpush2.bf16.msra.mxu0 %v1332
    %1562 = vmatprep.subr.bf16.mxu0 %v1331
    %1563 = vmatpush2.bf16.msra.mxu0 %v1330
    %1564 = vmatprep.subr.bf16.mxu0 %v1329
    %1565 = vmatpush2.bf16.msra.mxu0 %v1328
    %1566 = vmatprep.subr.bf16.mxu0 %v1327
    %1567 = vmatpush2.bf16.msra.mxu0 %v1326
    %1568 = vmatprep.subr.bf16.mxu0 %v1325
    %1569 = vmatpush2.bf16.msra.mxu0 %v1324
    %1570 = vmatprep.subr.bf16.mxu0 %v1323
    %1571 = vmatpush2.bf16.msra.mxu0 %v1322
    %1572 = vmatprep.mubr.bf16.mxu0 %v100
    %1573 = vmatmul.mubr.bf16.gmra.mxu0 %v99
    %v1574 = vpop.f32.mrf.mxu0
    %v1575 = vadd.f32 %v1522, %v1574
    %v1576 = vpop.f32.mrf.mxu0
    %v1577 = vadd.f32 %v1524, %v1576
    %v1578 = vpop.f32.mrf.mxu0
    %v1579 = vadd.f32 %v1526, %v1578
    %v1580 = vpop.f32.mrf.mxu0
    %v1581 = vadd.f32 %v1528, %v1580
    %1582 = vmatprep.mubr.bf16.mxu0 %v106
    %1583 = vmatmul.mubr.bf16.gmra.mxu0 %v105
    %v1584 = vpop.f32.mrf.mxu0
    %v1585 = vadd.f32 %v1532, %v1584
    %v1586 = vpop.f32.mrf.mxu0
    %v1587 = vadd.f32 %v1534, %v1586
    %v1588 = vpop.f32.mrf.mxu0
    %v1589 = vadd.f32 %v1536, %v1588
    %v1590 = vpop.f32.mrf.mxu0
    %v1591 = vadd.f32 %v1538, %v1590
    %1592 = vdwg.mxu0
    %v1593 = vrot.slane %v1575, 2
    %v1594 = vrot.slane %v1579, 2
    %v1595 = vrot.slane %v1585, 2
    %v1596 = vrot.slane %v1589, 2
    %vm1597 = vcmp.lt.s32.totalorder %v847, 6
    %v1598 = vsel %vm1597, %v1595, %v1596
    %v1599 = vsel %vm1597, %v1594, %v1595
    %v1600 = vsel %vm1597, %v1593, %v1594
    %v1601 = vsel %vm1597, %v1596, %v1593
    %v1602 = vrot.slane %v1577, 3
    %v1603 = vrot.slane %v1581, 3
    %v1604 = vrot.slane %v1587, 3
    %v1605 = vrot.slane %v1591, 3
    %vm1606 = vcmp.lt.s32.totalorder %v847, 5
    %v1607 = vsel %vm1606, %v1604, %v1605
    %v1608 = vsel %vm1606, %v1603, %v1604
    %v1609 = vsel %vm1606, %v1602, %v1603
    %v1610 = vsel %vm1606, %v1605, %v1602
    %v1611 = vadd.f32 %v1600, %v1609
    %v1612 = vadd.f32 %v1599, %v1608
    %v1613 = vadd.f32 %v1598, %v1607
    %v1614 = vadd.f32 %v1601, %v1610
    %v1615 = vadd.f32 %v853, %v1611
    %v1616 = vadd.f32 %v854, %v1612
    %v1617 = vadd.f32 %v855, %v1613
    %v1618 = vadd.f32 %v856, %v1614
    %s1619 = scalar_lea.vmem [#allocation5], 1536
    %v1620 = vld [vmem:[%s1619] sm:$0xff]
    %v1621 = vld [vmem:[%s1619 + $0x8] sm:$0xff]
    %v1622 = vld [vmem:[%s1619 + $0x10] sm:$0xff]
    %v1623 = vld [vmem:[%s1619 + $0x18] sm:$0xff]
    %v1624 = vld [vmem:[%s1619 + $0x20] sm:$0xff]
    %v1625 = vld [vmem:[%s1619 + $0x28] sm:$0xff]
    %v1626 = vld [vmem:[%s1619 + $0x30] sm:$0xff]
    %v1627 = vld [vmem:[%s1619 + $0x38] sm:$0xff]
    %v1628 = vld [vmem:[%s1619 + $0x40] sm:$0xff]
    %v1629 = vld [vmem:[%s1619 + $0x48] sm:$0xff]
    %v1630 = vld [vmem:[%s1619 + $0x50] sm:$0xff]
    %v1631 = vld [vmem:[%s1619 + $0x58] sm:$0xff]
    %v1632 = vld [vmem:[%s1619 + $0x60] sm:$0xff]
    %v1633 = vld [vmem:[%s1619 + $0x68] sm:$0xff]
    %v1634 = vld [vmem:[%s1619 + $0x70] sm:$0xff]
    %v1635 = vld [vmem:[%s1619 + $0x78] sm:$0xff]
    %v1636 = vld [vmem:[%s1619 + $0x80] sm:$0xff]
    %v1637 = vld [vmem:[%s1619 + $0x88] sm:$0xff]
    %v1638 = vld [vmem:[%s1619 + $0x90] sm:$0xff]
    %v1639 = vld [vmem:[%s1619 + $0x98] sm:$0xff]
    %v1640 = vld [vmem:[%s1619 + $0xa0] sm:$0xff]
    %v1641 = vld [vmem:[%s1619 + $0xa8] sm:$0xff]
    %v1642 = vld [vmem:[%s1619 + $0xb0] sm:$0xff]
    %v1643 = vld [vmem:[%s1619 + $0xb8] sm:$0xff]
    %v1644 = vld [vmem:[%s1619 + $0xc0] sm:$0xff]
    %v1645 = vld [vmem:[%s1619 + $0xc8] sm:$0xff]
    %v1646 = vld [vmem:[%s1619 + $0xd0] sm:$0xff]
    %v1647 = vld [vmem:[%s1619 + $0xd8] sm:$0xff]
    %v1648 = vld [vmem:[%s1619 + $0xe0] sm:$0xff]
    %v1649 = vld [vmem:[%s1619 + $0xe8] sm:$0xff]
    %v1650 = vld [vmem:[%s1619 + $0xf0] sm:$0xff]
    %v1651 = vld [vmem:[%s1619 + $0xf8] sm:$0xff]
    %v1652 = vld [vmem:[%s1619 + $0x100] sm:$0xff]
    %v1653 = vld [vmem:[%s1619 + $0x108] sm:$0xff]
    %v1654 = vld [vmem:[%s1619 + $0x110] sm:$0xff]
    %v1655 = vld [vmem:[%s1619 + $0x118] sm:$0xff]
    %v1656 = vld [vmem:[%s1619 + $0x120] sm:$0xff]
    %v1657 = vld [vmem:[%s1619 + $0x128] sm:$0xff]
    %v1658 = vld [vmem:[%s1619 + $0x130] sm:$0xff]
    %v1659 = vld [vmem:[%s1619 + $0x138] sm:$0xff]
    %v1660 = vld [vmem:[%s1619 + $0x140] sm:$0xff]
    %v1661 = vld [vmem:[%s1619 + $0x148] sm:$0xff]
    %v1662 = vld [vmem:[%s1619 + $0x150] sm:$0xff]
    %v1663 = vld [vmem:[%s1619 + $0x158] sm:$0xff]
    %v1664 = vld [vmem:[%s1619 + $0x160] sm:$0xff]
    %v1665 = vld [vmem:[%s1619 + $0x168] sm:$0xff]
    %v1666 = vld [vmem:[%s1619 + $0x170] sm:$0xff]
    %v1667 = vld [vmem:[%s1619 + $0x178] sm:$0xff]
    %v1668 = vld [vmem:[%s1619 + $0x180] sm:$0xff]
    %v1669 = vld [vmem:[%s1619 + $0x188] sm:$0xff]
    %v1670 = vld [vmem:[%s1619 + $0x190] sm:$0xff]
    %v1671 = vld [vmem:[%s1619 + $0x198] sm:$0xff]
    %v1672 = vld [vmem:[%s1619 + $0x1a0] sm:$0xff]
    %v1673 = vld [vmem:[%s1619 + $0x1a8] sm:$0xff]
    %v1674 = vld [vmem:[%s1619 + $0x1b0] sm:$0xff]
    %v1675 = vld [vmem:[%s1619 + $0x1b8] sm:$0xff]
    %v1676 = vld [vmem:[%s1619 + $0x1c0] sm:$0xff]
    %v1677 = vld [vmem:[%s1619 + $0x1c8] sm:$0xff]
    %v1678 = vld [vmem:[%s1619 + $0x1d0] sm:$0xff]
    %v1679 = vld [vmem:[%s1619 + $0x1d8] sm:$0xff]
    %v1680 = vld [vmem:[%s1619 + $0x1e0] sm:$0xff]
    %v1681 = vld [vmem:[%s1619 + $0x1e8] sm:$0xff]
    %v1682 = vld [vmem:[%s1619 + $0x1f0] sm:$0xff]
    %v1683 = vld [vmem:[%s1619 + $0x1f8] sm:$0xff]
    %v1684 = vld [vmem:[%s1619 + $0x200] sm:$0xff]
    %v1685 = vld [vmem:[%s1619 + $0x208] sm:$0xff]
    %v1686 = vld [vmem:[%s1619 + $0x210] sm:$0xff]
    %v1687 = vld [vmem:[%s1619 + $0x218] sm:$0xff]
    %v1688 = vld [vmem:[%s1619 + $0x220] sm:$0xff]
    %v1689 = vld [vmem:[%s1619 + $0x228] sm:$0xff]
    %v1690 = vld [vmem:[%s1619 + $0x230] sm:$0xff]
    %v1691 = vld [vmem:[%s1619 + $0x238] sm:$0xff]
    %v1692 = vld [vmem:[%s1619 + $0x240] sm:$0xff]
    %v1693 = vld [vmem:[%s1619 + $0x248] sm:$0xff]
    %v1694 = vld [vmem:[%s1619 + $0x250] sm:$0xff]
    %v1695 = vld [vmem:[%s1619 + $0x258] sm:$0xff]
    %v1696 = vld [vmem:[%s1619 + $0x260] sm:$0xff]
    %v1697 = vld [vmem:[%s1619 + $0x268] sm:$0xff]
    %v1698 = vld [vmem:[%s1619 + $0x270] sm:$0xff]
    %v1699 = vld [vmem:[%s1619 + $0x278] sm:$0xff]
    %v1700 = vld [vmem:[%s1619 + $0x280] sm:$0xff]
    %v1701 = vld [vmem:[%s1619 + $0x288] sm:$0xff]
    %v1702 = vld [vmem:[%s1619 + $0x290] sm:$0xff]
    %v1703 = vld [vmem:[%s1619 + $0x298] sm:$0xff]
    %v1704 = vld [vmem:[%s1619 + $0x2a0] sm:$0xff]
    %v1705 = vld [vmem:[%s1619 + $0x2a8] sm:$0xff]
    %v1706 = vld [vmem:[%s1619 + $0x2b0] sm:$0xff]
    %v1707 = vld [vmem:[%s1619 + $0x2b8] sm:$0xff]
    %v1708 = vld [vmem:[%s1619 + $0x2c0] sm:$0xff]
    %v1709 = vld [vmem:[%s1619 + $0x2c8] sm:$0xff]
    %v1710 = vld [vmem:[%s1619 + $0x2d0] sm:$0xff]
    %v1711 = vld [vmem:[%s1619 + $0x2d8] sm:$0xff]
    %v1712 = vld [vmem:[%s1619 + $0x2e0] sm:$0xff]
    %v1713 = vld [vmem:[%s1619 + $0x2e8] sm:$0xff]
    %v1714 = vld [vmem:[%s1619 + $0x2f0] sm:$0xff]
    %v1715 = vld [vmem:[%s1619 + $0x2f8] sm:$0xff]
    %v1812 = vunpack.c.l.b16 %v1620
    %v1813 = vunpack.c.h.b16 %v1620
    %v1814 = vunpack.c.l.b16 %v1621
    %v1815 = vunpack.c.h.b16 %v1621
    %v1816 = vunpack.c.l.b16 %v1622
    %v1817 = vunpack.c.h.b16 %v1622
    %v1818 = vunpack.c.l.b16 %v1623
    %v1819 = vunpack.c.h.b16 %v1623
    %v1820 = vunpack.c.l.b16 %v1624
    %v1821 = vunpack.c.h.b16 %v1624
    %v1822 = vunpack.c.l.b16 %v1625
    %v1823 = vunpack.c.h.b16 %v1625
    %v1824 = vunpack.c.l.b16 %v1626
    %v1825 = vunpack.c.h.b16 %v1626
    %v1826 = vunpack.c.l.b16 %v1627
    %v1827 = vunpack.c.h.b16 %v1627
    %v1828 = vunpack.c.l.b16 %v1628
    %v1829 = vunpack.c.h.b16 %v1628
    %v1830 = vunpack.c.l.b16 %v1629
    %v1831 = vunpack.c.h.b16 %v1629
    %v1832 = vunpack.c.l.b16 %v1630
    %v1833 = vunpack.c.h.b16 %v1630
    %v1834 = vunpack.c.l.b16 %v1631
    %v1835 = vunpack.c.h.b16 %v1631
    %v1836 = vunpack.c.l.b16 %v1632
    %v1837 = vunpack.c.h.b16 %v1632
    %v1838 = vunpack.c.l.b16 %v1633
    %v1839 = vunpack.c.h.b16 %v1633
    %v1840 = vunpack.c.l.b16 %v1634
    %v1841 = vunpack.c.h.b16 %v1634
    %v1842 = vunpack.c.l.b16 %v1635
    %v1843 = vunpack.c.h.b16 %v1635
    %v1844 = vunpack.c.l.b16 %v1636
    %v1845 = vunpack.c.h.b16 %v1636
    %v1846 = vunpack.c.l.b16 %v1637
    %v1847 = vunpack.c.h.b16 %v1637
    %v1848 = vunpack.c.l.b16 %v1638
    %v1849 = vunpack.c.h.b16 %v1638
    %v1850 = vunpack.c.l.b16 %v1639
    %v1851 = vunpack.c.h.b16 %v1639
    %v1852 = vunpack.c.l.b16 %v1640
    %v1853 = vunpack.c.h.b16 %v1640
    %v1854 = vunpack.c.l.b16 %v1641
    %v1855 = vunpack.c.h.b16 %v1641
    %v1856 = vunpack.c.l.b16 %v1642
    %v1857 = vunpack.c.h.b16 %v1642
    %v1858 = vunpack.c.l.b16 %v1643
    %v1859 = vunpack.c.h.b16 %v1643
    %v1860 = vunpack.c.l.b16 %v1644
    %v1861 = vunpack.c.h.b16 %v1644
    %v1862 = vunpack.c.l.b16 %v1645
    %v1863 = vunpack.c.h.b16 %v1645
    %v1864 = vunpack.c.l.b16 %v1646
    %v1865 = vunpack.c.h.b16 %v1646
    %v1866 = vunpack.c.l.b16 %v1647
    %v1867 = vunpack.c.h.b16 %v1647
    %v1868 = vunpack.c.l.b16 %v1648
    %v1869 = vunpack.c.h.b16 %v1648
    %v1870 = vunpack.c.l.b16 %v1649
    %v1871 = vunpack.c.h.b16 %v1649
    %v1872 = vunpack.c.l.b16 %v1650
    %v1873 = vunpack.c.h.b16 %v1650
    %v1874 = vunpack.c.l.b16 %v1651
    %v1875 = vunpack.c.h.b16 %v1651
    %v1876 = vunpack.c.l.b16 %v1652
    %v1877 = vunpack.c.h.b16 %v1652
    %v1878 = vunpack.c.l.b16 %v1653
    %v1879 = vunpack.c.h.b16 %v1653
    %v1880 = vunpack.c.l.b16 %v1654
    %v1881 = vunpack.c.h.b16 %v1654
    %v1882 = vunpack.c.l.b16 %v1655
    %v1883 = vunpack.c.h.b16 %v1655
    %v1884 = vunpack.c.l.b16 %v1656
    %v1885 = vunpack.c.h.b16 %v1656
    %v1886 = vunpack.c.l.b16 %v1657
    %v1887 = vunpack.c.h.b16 %v1657
    %v1888 = vunpack.c.l.b16 %v1658
    %v1889 = vunpack.c.h.b16 %v1658
    %v1890 = vunpack.c.l.b16 %v1659
    %v1891 = vunpack.c.h.b16 %v1659
    %v1892 = vunpack.c.l.b16 %v1660
    %v1893 = vunpack.c.h.b16 %v1660
    %v1894 = vunpack.c.l.b16 %v1661
    %v1895 = vunpack.c.h.b16 %v1661
    %v1896 = vunpack.c.l.b16 %v1662
    %v1897 = vunpack.c.h.b16 %v1662
    %v1898 = vunpack.c.l.b16 %v1663
    %v1899 = vunpack.c.h.b16 %v1663
    %v1900 = vunpack.c.l.b16 %v1664
    %v1901 = vunpack.c.h.b16 %v1664
    %v1902 = vunpack.c.l.b16 %v1665
    %v1903 = vunpack.c.h.b16 %v1665
    %v1904 = vunpack.c.l.b16 %v1666
    %v1905 = vunpack.c.h.b16 %v1666
    %v1906 = vunpack.c.l.b16 %v1667
    %v1907 = vunpack.c.h.b16 %v1667
    %v1908 = vunpack.c.l.b16 %v1668
    %v1909 = vunpack.c.h.b16 %v1668
    %v1910 = vunpack.c.l.b16 %v1669
    %v1911 = vunpack.c.h.b16 %v1669
    %v1912 = vunpack.c.l.b16 %v1670
    %v1913 = vunpack.c.h.b16 %v1670
    %v1914 = vunpack.c.l.b16 %v1671
    %v1915 = vunpack.c.h.b16 %v1671
    %v1916 = vunpack.c.l.b16 %v1672
    %v1917 = vunpack.c.h.b16 %v1672
    %v1918 = vunpack.c.l.b16 %v1673
    %v1919 = vunpack.c.h.b16 %v1673
    %v1920 = vunpack.c.l.b16 %v1674
    %v1921 = vunpack.c.h.b16 %v1674
    %v1922 = vunpack.c.l.b16 %v1675
    %v1923 = vunpack.c.h.b16 %v1675
    %v1924 = vunpack.c.l.b16 %v1676
    %v1925 = vunpack.c.h.b16 %v1676
    %v1926 = vunpack.c.l.b16 %v1677
    %v1927 = vunpack.c.h.b16 %v1677
    %v1928 = vunpack.c.l.b16 %v1678
    %v1929 = vunpack.c.h.b16 %v1678
    %v1930 = vunpack.c.l.b16 %v1679
    %v1931 = vunpack.c.h.b16 %v1679
    %v1932 = vunpack.c.l.b16 %v1680
    %v1933 = vunpack.c.h.b16 %v1680
    %v1934 = vunpack.c.l.b16 %v1681
    %v1935 = vunpack.c.h.b16 %v1681
    %v1936 = vunpack.c.l.b16 %v1682
    %v1937 = vunpack.c.h.b16 %v1682
    %v1938 = vunpack.c.l.b16 %v1683
    %v1939 = vunpack.c.h.b16 %v1683
    %v1940 = vunpack.c.l.b16 %v1684
    %v1941 = vunpack.c.h.b16 %v1684
    %v1942 = vunpack.c.l.b16 %v1685
    %v1943 = vunpack.c.h.b16 %v1685
    %v1944 = vunpack.c.l.b16 %v1686
    %v1945 = vunpack.c.h.b16 %v1686
    %v1946 = vunpack.c.l.b16 %v1687
    %v1947 = vunpack.c.h.b16 %v1687
    %v1948 = vunpack.c.l.b16 %v1688
    %v1949 = vunpack.c.h.b16 %v1688
    %v1950 = vunpack.c.l.b16 %v1689
    %v1951 = vunpack.c.h.b16 %v1689
    %v1952 = vunpack.c.l.b16 %v1690
    %v1953 = vunpack.c.h.b16 %v1690
    %v1954 = vunpack.c.l.b16 %v1691
    %v1955 = vunpack.c.h.b16 %v1691
    %v1956 = vunpack.c.l.b16 %v1692
    %v1957 = vunpack.c.h.b16 %v1692
    %v1958 = vunpack.c.l.b16 %v1693
    %v1959 = vunpack.c.h.b16 %v1693
    %v1960 = vunpack.c.l.b16 %v1694
    %v1961 = vunpack.c.h.b16 %v1694
    %v1962 = vunpack.c.l.b16 %v1695
    %v1963 = vunpack.c.h.b16 %v1695
    %v1964 = vunpack.c.l.b16 %v1696
    %v1965 = vunpack.c.h.b16 %v1696
    %v1966 = vunpack.c.l.b16 %v1697
    %v1967 = vunpack.c.h.b16 %v1697
    %v1968 = vunpack.c.l.b16 %v1698
    %v1969 = vunpack.c.h.b16 %v1698
    %v1970 = vunpack.c.l.b16 %v1699
    %v1971 = vunpack.c.h.b16 %v1699
    %v1972 = vunpack.c.l.b16 %v1700
    %v1973 = vunpack.c.h.b16 %v1700
    %v1974 = vunpack.c.l.b16 %v1701
    %v1975 = vunpack.c.h.b16 %v1701
    %v1976 = vunpack.c.l.b16 %v1702
    %v1977 = vunpack.c.h.b16 %v1702
    %v1978 = vunpack.c.l.b16 %v1703
    %v1979 = vunpack.c.h.b16 %v1703
    %v1980 = vunpack.c.l.b16 %v1704
    %v1981 = vunpack.c.h.b16 %v1704
    %v1982 = vunpack.c.l.b16 %v1705
    %v1983 = vunpack.c.h.b16 %v1705
    %v1984 = vunpack.c.l.b16 %v1706
    %v1985 = vunpack.c.h.b16 %v1706
    %v1986 = vunpack.c.l.b16 %v1707
    %v1987 = vunpack.c.h.b16 %v1707
    %v1988 = vunpack.c.l.b16 %v1708
    %v1989 = vunpack.c.h.b16 %v1708
    %v1990 = vunpack.c.l.b16 %v1709
    %v1991 = vunpack.c.h.b16 %v1709
    %v1992 = vunpack.c.l.b16 %v1710
    %v1993 = vunpack.c.h.b16 %v1710
    %v1994 = vunpack.c.l.b16 %v1711
    %v1995 = vunpack.c.h.b16 %v1711
    %v1996 = vunpack.c.l.b16 %v1712
    %v1997 = vunpack.c.h.b16 %v1712
    %v1998 = vunpack.c.l.b16 %v1713
    %v1999 = vunpack.c.h.b16 %v1713
    %v2000 = vunpack.c.l.b16 %v1714
    %v2001 = vunpack.c.h.b16 %v1714
    %v2002 = vunpack.c.l.b16 %v1715
    %v2003 = vunpack.c.h.b16 %v1715
    %v2004 = vpack.c.b16 %v1814, %v1812
    %v2005 = vpack.c.b16 %v1815, %v1813
    %v2006 = vpack.c.b16 %v1818, %v1816
    %v2007 = vpack.c.b16 %v1819, %v1817
    %v2008 = vpack.c.b16 %v1822, %v1820
    %v2009 = vpack.c.b16 %v1823, %v1821
    %v2010 = vpack.c.b16 %v1826, %v1824
    %v2011 = vpack.c.b16 %v1827, %v1825
    %v2012 = vpack.c.b16 %v1830, %v1828
    %v2013 = vpack.c.b16 %v1831, %v1829
    %v2014 = vpack.c.b16 %v1834, %v1832
    %v2015 = vpack.c.b16 %v1835, %v1833
    %v2016 = vpack.c.b16 %v1838, %v1836
    %v2017 = vpack.c.b16 %v1839, %v1837
    %v2018 = vpack.c.b16 %v1842, %v1840
    %v2019 = vpack.c.b16 %v1843, %v1841
    %v2020 = vpack.c.b16 %v1846, %v1844
    %v2021 = vpack.c.b16 %v1847, %v1845
    %v2022 = vpack.c.b16 %v1850, %v1848
    %v2023 = vpack.c.b16 %v1851, %v1849
    %v2024 = vpack.c.b16 %v1854, %v1852
    %v2025 = vpack.c.b16 %v1855, %v1853
    %v2026 = vpack.c.b16 %v1858, %v1856
    %v2027 = vpack.c.b16 %v1859, %v1857
    %v2028 = vpack.c.b16 %v1862, %v1860
    %v2029 = vpack.c.b16 %v1863, %v1861
    %v2030 = vpack.c.b16 %v1866, %v1864
    %v2031 = vpack.c.b16 %v1867, %v1865
    %v2032 = vpack.c.b16 %v1870, %v1868
    %v2033 = vpack.c.b16 %v1871, %v1869
    %v2034 = vpack.c.b16 %v1874, %v1872
    %v2035 = vpack.c.b16 %v1875, %v1873
    %v2036 = vpack.c.b16 %v1878, %v1876
    %v2037 = vpack.c.b16 %v1879, %v1877
    %v2038 = vpack.c.b16 %v1882, %v1880
    %v2039 = vpack.c.b16 %v1883, %v1881
    %v2040 = vpack.c.b16 %v1886, %v1884
    %v2041 = vpack.c.b16 %v1887, %v1885
    %v2042 = vpack.c.b16 %v1890, %v1888
    %v2043 = vpack.c.b16 %v1891, %v1889
    %v2044 = vpack.c.b16 %v1894, %v1892
    %v2045 = vpack.c.b16 %v1895, %v1893
    %v2046 = vpack.c.b16 %v1898, %v1896
    %v2047 = vpack.c.b16 %v1899, %v1897
    %v2048 = vpack.c.b16 %v1902, %v1900
    %v2049 = vpack.c.b16 %v1903, %v1901
    %v2050 = vpack.c.b16 %v1906, %v1904
    %v2051 = vpack.c.b16 %v1907, %v1905
    %v2052 = vpack.c.b16 %v1910, %v1908
    %v2053 = vpack.c.b16 %v1911, %v1909
    %v2054 = vpack.c.b16 %v1914, %v1912
    %v2055 = vpack.c.b16 %v1915, %v1913
    %v2056 = vpack.c.b16 %v1918, %v1916
    %v2057 = vpack.c.b16 %v1919, %v1917
    %v2058 = vpack.c.b16 %v1922, %v1920
    %v2059 = vpack.c.b16 %v1923, %v1921
    %v2060 = vpack.c.b16 %v1926, %v1924
    %v2061 = vpack.c.b16 %v1927, %v1925
    %v2062 = vpack.c.b16 %v1930, %v1928
    %v2063 = vpack.c.b16 %v1931, %v1929
    %v2064 = vpack.c.b16 %v1934, %v1932
    %v2065 = vpack.c.b16 %v1935, %v1933
    %v2066 = vpack.c.b16 %v1938, %v1936
    %v2067 = vpack.c.b16 %v1939, %v1937
    %v2068 = vpack.c.b16 %v1942, %v1940
    %v2069 = vpack.c.b16 %v1943, %v1941
    %v2070 = vpack.c.b16 %v1946, %v1944
    %v2071 = vpack.c.b16 %v1947, %v1945
    %v2072 = vpack.c.b16 %v1950, %v1948
    %v2073 = vpack.c.b16 %v1951, %v1949
    %v2074 = vpack.c.b16 %v1954, %v1952
    %v2075 = vpack.c.b16 %v1955, %v1953
    %v2076 = vpack.c.b16 %v1958, %v1956
    %v2077 = vpack.c.b16 %v1959, %v1957
    %v2078 = vpack.c.b16 %v1962, %v1960
    %v2079 = vpack.c.b16 %v1963, %v1961
    %v2080 = vpack.c.b16 %v1966, %v1964
    %v2081 = vpack.c.b16 %v1967, %v1965
    %v2082 = vpack.c.b16 %v1970, %v1968
    %v2083 = vpack.c.b16 %v1971, %v1969
    %v2084 = vpack.c.b16 %v1974, %v1972
    %v2085 = vpack.c.b16 %v1975, %v1973
    %v2086 = vpack.c.b16 %v1978, %v1976
    %v2087 = vpack.c.b16 %v1979, %v1977
    %v2088 = vpack.c.b16 %v1982, %v1980
    %v2089 = vpack.c.b16 %v1983, %v1981
    %v2090 = vpack.c.b16 %v1986, %v1984
    %v2091 = vpack.c.b16 %v1987, %v1985
    %v2092 = vpack.c.b16 %v1990, %v1988
    %v2093 = vpack.c.b16 %v1991, %v1989
    %v2094 = vpack.c.b16 %v1994, %v1992
    %v2095 = vpack.c.b16 %v1995, %v1993
    %v2096 = vpack.c.b16 %v1998, %v1996
    %v2097 = vpack.c.b16 %v1999, %v1997
    %v2098 = vpack.c.b16 %v2002, %v2000
    %v2099 = vpack.c.b16 %v2003, %v2001
    %2196 = vmatprep.subr.bf16.mxu0 %v2019
    %2197 = vmatpush1.bf16.msra.mxu0 %v2018
    %2198 = vmatprep.subr.bf16.mxu0 %v2017
    %2199 = vmatpush1.bf16.msra.mxu0 %v2016
    %2200 = vmatprep.subr.bf16.mxu0 %v2015
    %2201 = vmatpush1.bf16.msra.mxu0 %v2014
    %2202 = vmatprep.subr.bf16.mxu0 %v2013
    %2203 = vmatpush1.bf16.msra.mxu0 %v2012
    %2204 = vmatprep.subr.bf16.mxu0 %v2011
    %2205 = vmatpush1.bf16.msra.mxu0 %v2010
    %2206 = vmatprep.subr.bf16.mxu0 %v2009
    %2207 = vmatpush1.bf16.msra.mxu0 %v2008
    %2208 = vmatprep.subr.bf16.mxu0 %v2007
    %2209 = vmatpush1.bf16.msra.mxu0 %v2006
    %2210 = vmatprep.subr.bf16.mxu0 %v2005
    %2211 = vmatpush1.bf16.msra.mxu0 %v2004
    %2212 = vmatprep.subr.bf16.mxu0 %v2035
    %2213 = vmatpush2.bf16.msra.mxu0 %v2034
    %2214 = vmatprep.subr.bf16.mxu0 %v2033
    %2215 = vmatpush2.bf16.msra.mxu0 %v2032
    %2216 = vmatprep.subr.bf16.mxu0 %v2031
    %2217 = vmatpush2.bf16.msra.mxu0 %v2030
    %2218 = vmatprep.subr.bf16.mxu0 %v2029
    %2219 = vmatpush2.bf16.msra.mxu0 %v2028
    %2220 = vmatprep.subr.bf16.mxu0 %v2027
    %2221 = vmatpush2.bf16.msra.mxu0 %v2026
    %2222 = vmatprep.subr.bf16.mxu0 %v2025
    %2223 = vmatpush2.bf16.msra.mxu0 %v2024
    %2224 = vmatprep.subr.bf16.mxu0 %v2023
    %2225 = vmatpush2.bf16.msra.mxu0 %v2022
    %2226 = vmatprep.subr.bf16.mxu0 %v2021
    %2227 = vmatpush2.bf16.msra.mxu0 %v2020
    %2228 = vmatprep.mubr.bf16.mxu0 %v96
    %2229 = vmatmul.mubr.bf16.gmra.mxu0 %v95
    %v2230 = vpop.f32.mrf.mxu0
    %v2231 = vadd.f32 0.0, %v2230
    %v2232 = vpop.f32.mrf.mxu0
    %v2233 = vadd.f32 0.0, %v2232
    %v2234 = vpop.f32.mrf.mxu0
    %v2235 = vadd.f32 0.0, %v2234
    %v2236 = vpop.f32.mrf.mxu0
    %v2237 = vadd.f32 0.0, %v2236
    %2238 = vmatprep.mubr.bf16.mxu0 %v102
    %2239 = vmatmul.mubr.bf16.gmra.mxu0 %v101
    %v2240 = vpop.f32.mrf.mxu0
    %v2241 = vadd.f32 0.0, %v2240
    %v2242 = vpop.f32.mrf.mxu0
    %v2243 = vadd.f32 0.0, %v2242
    %v2244 = vpop.f32.mrf.mxu0
    %v2245 = vadd.f32 0.0, %v2244
    %v2246 = vpop.f32.mrf.mxu0
    %v2247 = vadd.f32 0.0, %v2246
    %2248 = vdwg.mxu0
    %2249 = vmatprep.subr.bf16.mxu0 %v2051
    %2250 = vmatpush1.bf16.msra.mxu0 %v2050
    %2251 = vmatprep.subr.bf16.mxu0 %v2049
    %2252 = vmatpush1.bf16.msra.mxu0 %v2048
    %2253 = vmatprep.subr.bf16.mxu0 %v2047
    %2254 = vmatpush1.bf16.msra.mxu0 %v2046
    %2255 = vmatprep.subr.bf16.mxu0 %v2045
    %2256 = vmatpush1.bf16.msra.mxu0 %v2044
    %2257 = vmatprep.subr.bf16.mxu0 %v2043
    %2258 = vmatpush1.bf16.msra.mxu0 %v2042
    %2259 = vmatprep.subr.bf16.mxu0 %v2041
    %2260 = vmatpush1.bf16.msra.mxu0 %v2040
    %2261 = vmatprep.subr.bf16.mxu0 %v2039
    %2262 = vmatpush1.bf16.msra.mxu0 %v2038
    %2263 = vmatprep.subr.bf16.mxu0 %v2037
    %2264 = vmatpush1.bf16.msra.mxu0 %v2036
    %2265 = vmatprep.subr.bf16.mxu0 %v2067
    %2266 = vmatpush2.bf16.msra.mxu0 %v2066
    %2267 = vmatprep.subr.bf16.mxu0 %v2065
    %2268 = vmatpush2.bf16.msra.mxu0 %v2064
    %2269 = vmatprep.subr.bf16.mxu0 %v2063
    %2270 = vmatpush2.bf16.msra.mxu0 %v2062
    %2271 = vmatprep.subr.bf16.mxu0 %v2061
    %2272 = vmatpush2.bf16.msra.mxu0 %v2060
    %2273 = vmatprep.subr.bf16.mxu0 %v2059
    %2274 = vmatpush2.bf16.msra.mxu0 %v2058
    %2275 = vmatprep.subr.bf16.mxu0 %v2057
    %2276 = vmatpush2.bf16.msra.mxu0 %v2056
    %2277 = vmatprep.subr.bf16.mxu0 %v2055
    %2278 = vmatpush2.bf16.msra.mxu0 %v2054
    %2279 = vmatprep.subr.bf16.mxu0 %v2053
    %2280 = vmatpush2.bf16.msra.mxu0 %v2052
    %2281 = vmatprep.mubr.bf16.mxu0 %v98
    %2282 = vmatmul.mubr.bf16.gmra.mxu0 %v97
    %v2283 = vpop.f32.mrf.mxu0
    %v2284 = vadd.f32 %v2231, %v2283
    %v2285 = vpop.f32.mrf.mxu0
    %v2286 = vadd.f32 %v2233, %v2285
    %v2287 = vpop.f32.mrf.mxu0
    %v2288 = vadd.f32 %v2235, %v2287
    %v2289 = vpop.f32.mrf.mxu0
    %v2290 = vadd.f32 %v2237, %v2289
    %2291 = vmatprep.mubr.bf16.mxu0 %v104
    %2292 = vmatmul.mubr.bf16.gmra.mxu0 %v103
    %v2293 = vpop.f32.mrf.mxu0
    %v2294 = vadd.f32 %v2241, %v2293
    %v2295 = vpop.f32.mrf.mxu0
    %v2296 = vadd.f32 %v2243, %v2295
    %v2297 = vpop.f32.mrf.mxu0
    %v2298 = vadd.f32 %v2245, %v2297
    %v2299 = vpop.f32.mrf.mxu0
    %v2300 = vadd.f32 %v2247, %v2299
    %2301 = vdwg.mxu0
    %2302 = vmatprep.subr.bf16.mxu0 %v2083
    %2303 = vmatpush1.bf16.msra.mxu0 %v2082
    %2304 = vmatprep.subr.bf16.mxu0 %v2081
    %2305 = vmatpush1.bf16.msra.mxu0 %v2080
    %2306 = vmatprep.subr.bf16.mxu0 %v2079
    %2307 = vmatpush1.bf16.msra.mxu0 %v2078
    %2308 = vmatprep.subr.bf16.mxu0 %v2077
    %2309 = vmatpush1.bf16.msra.mxu0 %v2076
    %2310 = vmatprep.subr.bf16.mxu0 %v2075
    %2311 = vmatpush1.bf16.msra.mxu0 %v2074
    %2312 = vmatprep.subr.bf16.mxu0 %v2073
    %2313 = vmatpush1.bf16.msra.mxu0 %v2072
    %2314 = vmatprep.subr.bf16.mxu0 %v2071
    %2315 = vmatpush1.bf16.msra.mxu0 %v2070
    %2316 = vmatprep.subr.bf16.mxu0 %v2069
    %2317 = vmatpush1.bf16.msra.mxu0 %v2068
    %2318 = vmatprep.subr.bf16.mxu0 %v2099
    %2319 = vmatpush2.bf16.msra.mxu0 %v2098
    %2320 = vmatprep.subr.bf16.mxu0 %v2097
    %2321 = vmatpush2.bf16.msra.mxu0 %v2096
    %2322 = vmatprep.subr.bf16.mxu0 %v2095
    %2323 = vmatpush2.bf16.msra.mxu0 %v2094
    %2324 = vmatprep.subr.bf16.mxu0 %v2093
    %2325 = vmatpush2.bf16.msra.mxu0 %v2092
    %2326 = vmatprep.subr.bf16.mxu0 %v2091
    %2327 = vmatpush2.bf16.msra.mxu0 %v2090
    %2328 = vmatprep.subr.bf16.mxu0 %v2089
    %2329 = vmatpush2.bf16.msra.mxu0 %v2088
    %2330 = vmatprep.subr.bf16.mxu0 %v2087
    %2331 = vmatpush2.bf16.msra.mxu0 %v2086
    %2332 = vmatprep.subr.bf16.mxu0 %v2085
    %2333 = vmatpush2.bf16.msra.mxu0 %v2084
    %2334 = vmatprep.mubr.bf16.mxu0 %v100
    %2335 = vmatmul.mubr.bf16.gmra.mxu0 %v99
    %v2336 = vpop.f32.mrf.mxu0
    %v2337 = vadd.f32 %v2284, %v2336
    %v2338 = vpop.f32.mrf.mxu0
    %v2339 = vadd.f32 %v2286, %v2338
    %v2340 = vpop.f32.mrf.mxu0
    %v2341 = vadd.f32 %v2288, %v2340
    %v2342 = vpop.f32.mrf.mxu0
    %v2343 = vadd.f32 %v2290, %v2342
    %2344 = vmatprep.mubr.bf16.mxu0 %v106
    %2345 = vmatmul.mubr.bf16.gmra.mxu0 %v105
    %v2346 = vpop.f32.mrf.mxu0
    %v2347 = vadd.f32 %v2294, %v2346
    %v2348 = vpop.f32.mrf.mxu0
    %v2349 = vadd.f32 %v2296, %v2348
    %v2350 = vpop.f32.mrf.mxu0
    %v2351 = vadd.f32 %v2298, %v2350
    %v2352 = vpop.f32.mrf.mxu0
    %v2353 = vadd.f32 %v2300, %v2352
    %2354 = vdwg.mxu0
    %v2355 = vrot.slane %v2337, 4
    %v2356 = vrot.slane %v2341, 4
    %v2357 = vrot.slane %v2347, 4
    %v2358 = vrot.slane %v2351, 4
    %vm2359 = vcmp.lt.s32.totalorder %v847, 4
    %v2360 = vsel %vm2359, %v2357, %v2358
    %v2361 = vsel %vm2359, %v2356, %v2357
    %v2362 = vsel %vm2359, %v2355, %v2356
    %v2363 = vsel %vm2359, %v2358, %v2355
    %v2364 = vrot.slane %v2339, 5
    %v2365 = vrot.slane %v2343, 5
    %v2366 = vrot.slane %v2349, 5
    %v2367 = vrot.slane %v2353, 5
    %vm2368 = vcmp.lt.s32.totalorder %v847, 3
    %v2369 = vsel %vm2368, %v2366, %v2367
    %v2370 = vsel %vm2368, %v2365, %v2366
    %v2371 = vsel %vm2368, %v2364, %v2365
    %v2372 = vsel %vm2368, %v2367, %v2364
    %v2373 = vadd.f32 %v2362, %v2371
    %v2374 = vadd.f32 %v2361, %v2370
    %v2375 = vadd.f32 %v2360, %v2369
    %v2376 = vadd.f32 %v2363, %v2372
    %v2377 = vadd.f32 %v1615, %v2373
    %v2378 = vadd.f32 %v1616, %v2374
    %v2379 = vadd.f32 %v1617, %v2375
    %v2380 = vadd.f32 %v1618, %v2376
    %s2381 = scalar_lea.vmem [#allocation5], 2304
    %v2382 = vld [vmem:[%s2381] sm:$0xff]
    %v2383 = vld [vmem:[%s2381 + $0x8] sm:$0xff]
    %v2384 = vld [vmem:[%s2381 + $0x10] sm:$0xff]
    %v2385 = vld [vmem:[%s2381 + $0x18] sm:$0xff]
    %v2386 = vld [vmem:[%s2381 + $0x20] sm:$0xff]
    %v2387 = vld [vmem:[%s2381 + $0x28] sm:$0xff]
    %v2388 = vld [vmem:[%s2381 + $0x30] sm:$0xff]
    %v2389 = vld [vmem:[%s2381 + $0x38] sm:$0xff]
    %v2390 = vld [vmem:[%s2381 + $0x40] sm:$0xff]
    %v2391 = vld [vmem:[%s2381 + $0x48] sm:$0xff]
    %v2392 = vld [vmem:[%s2381 + $0x50] sm:$0xff]
    %v2393 = vld [vmem:[%s2381 + $0x58] sm:$0xff]
    %v2394 = vld [vmem:[%s2381 + $0x60] sm:$0xff]
    %v2395 = vld [vmem:[%s2381 + $0x68] sm:$0xff]
    %v2396 = vld [vmem:[%s2381 + $0x70] sm:$0xff]
    %v2397 = vld [vmem:[%s2381 + $0x78] sm:$0xff]
    %v2398 = vld [vmem:[%s2381 + $0x80] sm:$0xff]
    %v2399 = vld [vmem:[%s2381 + $0x88] sm:$0xff]
    %v2400 = vld [vmem:[%s2381 + $0x90] sm:$0xff]
    %v2401 = vld [vmem:[%s2381 + $0x98] sm:$0xff]
    %v2402 = vld [vmem:[%s2381 + $0xa0] sm:$0xff]
    %v2403 = vld [vmem:[%s2381 + $0xa8] sm:$0xff]
    %v2404 = vld [vmem:[%s2381 + $0xb0] sm:$0xff]
    %v2405 = vld [vmem:[%s2381 + $0xb8] sm:$0xff]
    %v2406 = vld [vmem:[%s2381 + $0xc0] sm:$0xff]
    %v2407 = vld [vmem:[%s2381 + $0xc8] sm:$0xff]
    %v2408 = vld [vmem:[%s2381 + $0xd0] sm:$0xff]
    %v2409 = vld [vmem:[%s2381 + $0xd8] sm:$0xff]
    %v2410 = vld [vmem:[%s2381 + $0xe0] sm:$0xff]
    %v2411 = vld [vmem:[%s2381 + $0xe8] sm:$0xff]
    %v2412 = vld [vmem:[%s2381 + $0xf0] sm:$0xff]
    %v2413 = vld [vmem:[%s2381 + $0xf8] sm:$0xff]
    %v2414 = vld [vmem:[%s2381 + $0x100] sm:$0xff]
    %v2415 = vld [vmem:[%s2381 + $0x108] sm:$0xff]
    %v2416 = vld [vmem:[%s2381 + $0x110] sm:$0xff]
    %v2417 = vld [vmem:[%s2381 + $0x118] sm:$0xff]
    %v2418 = vld [vmem:[%s2381 + $0x120] sm:$0xff]
    %v2419 = vld [vmem:[%s2381 + $0x128] sm:$0xff]
    %v2420 = vld [vmem:[%s2381 + $0x130] sm:$0xff]
    %v2421 = vld [vmem:[%s2381 + $0x138] sm:$0xff]
    %v2422 = vld [vmem:[%s2381 + $0x140] sm:$0xff]
    %v2423 = vld [vmem:[%s2381 + $0x148] sm:$0xff]
    %v2424 = vld [vmem:[%s2381 + $0x150] sm:$0xff]
    %v2425 = vld [vmem:[%s2381 + $0x158] sm:$0xff]
    %v2426 = vld [vmem:[%s2381 + $0x160] sm:$0xff]
    %v2427 = vld [vmem:[%s2381 + $0x168] sm:$0xff]
    %v2428 = vld [vmem:[%s2381 + $0x170] sm:$0xff]
    %v2429 = vld [vmem:[%s2381 + $0x178] sm:$0xff]
    %v2430 = vld [vmem:[%s2381 + $0x180] sm:$0xff]
    %v2431 = vld [vmem:[%s2381 + $0x188] sm:$0xff]
    %v2432 = vld [vmem:[%s2381 + $0x190] sm:$0xff]
    %v2433 = vld [vmem:[%s2381 + $0x198] sm:$0xff]
    %v2434 = vld [vmem:[%s2381 + $0x1a0] sm:$0xff]
    %v2435 = vld [vmem:[%s2381 + $0x1a8] sm:$0xff]
    %v2436 = vld [vmem:[%s2381 + $0x1b0] sm:$0xff]
    %v2437 = vld [vmem:[%s2381 + $0x1b8] sm:$0xff]
    %v2438 = vld [vmem:[%s2381 + $0x1c0] sm:$0xff]
    %v2439 = vld [vmem:[%s2381 + $0x1c8] sm:$0xff]
    %v2440 = vld [vmem:[%s2381 + $0x1d0] sm:$0xff]
    %v2441 = vld [vmem:[%s2381 + $0x1d8] sm:$0xff]
    %v2442 = vld [vmem:[%s2381 + $0x1e0] sm:$0xff]
    %v2443 = vld [vmem:[%s2381 + $0x1e8] sm:$0xff]
    %v2444 = vld [vmem:[%s2381 + $0x1f0] sm:$0xff]
    %v2445 = vld [vmem:[%s2381 + $0x1f8] sm:$0xff]
    %v2446 = vld [vmem:[%s2381 + $0x200] sm:$0xff]
    %v2447 = vld [vmem:[%s2381 + $0x208] sm:$0xff]
    %v2448 = vld [vmem:[%s2381 + $0x210] sm:$0xff]
    %v2449 = vld [vmem:[%s2381 + $0x218] sm:$0xff]
    %v2450 = vld [vmem:[%s2381 + $0x220] sm:$0xff]
    %v2451 = vld [vmem:[%s2381 + $0x228] sm:$0xff]
    %v2452 = vld [vmem:[%s2381 + $0x230] sm:$0xff]
    %v2453 = vld [vmem:[%s2381 + $0x238] sm:$0xff]
    %v2454 = vld [vmem:[%s2381 + $0x240] sm:$0xff]
    %v2455 = vld [vmem:[%s2381 + $0x248] sm:$0xff]
    %v2456 = vld [vmem:[%s2381 + $0x250] sm:$0xff]
    %v2457 = vld [vmem:[%s2381 + $0x258] sm:$0xff]
    %v2458 = vld [vmem:[%s2381 + $0x260] sm:$0xff]
    %v2459 = vld [vmem:[%s2381 + $0x268] sm:$0xff]
    %v2460 = vld [vmem:[%s2381 + $0x270] sm:$0xff]
    %v2461 = vld [vmem:[%s2381 + $0x278] sm:$0xff]
    %v2462 = vld [vmem:[%s2381 + $0x280] sm:$0xff]
    %v2463 = vld [vmem:[%s2381 + $0x288] sm:$0xff]
    %v2464 = vld [vmem:[%s2381 + $0x290] sm:$0xff]
    %v2465 = vld [vmem:[%s2381 + $0x298] sm:$0xff]
    %v2466 = vld [vmem:[%s2381 + $0x2a0] sm:$0xff]
    %v2467 = vld [vmem:[%s2381 + $0x2a8] sm:$0xff]
    %v2468 = vld [vmem:[%s2381 + $0x2b0] sm:$0xff]
    %v2469 = vld [vmem:[%s2381 + $0x2b8] sm:$0xff]
    %v2470 = vld [vmem:[%s2381 + $0x2c0] sm:$0xff]
    %v2471 = vld [vmem:[%s2381 + $0x2c8] sm:$0xff]
    %v2472 = vld [vmem:[%s2381 + $0x2d0] sm:$0xff]
    %v2473 = vld [vmem:[%s2381 + $0x2d8] sm:$0xff]
    %v2474 = vld [vmem:[%s2381 + $0x2e0] sm:$0xff]
    %v2475 = vld [vmem:[%s2381 + $0x2e8] sm:$0xff]
    %v2476 = vld [vmem:[%s2381 + $0x2f0] sm:$0xff]
    %v2477 = vld [vmem:[%s2381 + $0x2f8] sm:$0xff]
    %v2574 = vunpack.c.l.b16 %v2382
    %v2575 = vunpack.c.h.b16 %v2382
    %v2576 = vunpack.c.l.b16 %v2383
    %v2577 = vunpack.c.h.b16 %v2383
    %v2578 = vunpack.c.l.b16 %v2384
    %v2579 = vunpack.c.h.b16 %v2384
    %v2580 = vunpack.c.l.b16 %v2385
    %v2581 = vunpack.c.h.b16 %v2385
    %v2582 = vunpack.c.l.b16 %v2386
    %v2583 = vunpack.c.h.b16 %v2386
    %v2584 = vunpack.c.l.b16 %v2387
    %v2585 = vunpack.c.h.b16 %v2387
    %v2586 = vunpack.c.l.b16 %v2388
    %v2587 = vunpack.c.h.b16 %v2388
    %v2588 = vunpack.c.l.b16 %v2389
    %v2589 = vunpack.c.h.b16 %v2389
    %v2590 = vunpack.c.l.b16 %v2390
    %v2591 = vunpack.c.h.b16 %v2390
    %v2592 = vunpack.c.l.b16 %v2391
    %v2593 = vunpack.c.h.b16 %v2391
    %v2594 = vunpack.c.l.b16 %v2392
    %v2595 = vunpack.c.h.b16 %v2392
    %v2596 = vunpack.c.l.b16 %v2393
    %v2597 = vunpack.c.h.b16 %v2393
    %v2598 = vunpack.c.l.b16 %v2394
    %v2599 = vunpack.c.h.b16 %v2394
    %v2600 = vunpack.c.l.b16 %v2395
    %v2601 = vunpack.c.h.b16 %v2395
    %v2602 = vunpack.c.l.b16 %v2396
    %v2603 = vunpack.c.h.b16 %v2396
    %v2604 = vunpack.c.l.b16 %v2397
    %v2605 = vunpack.c.h.b16 %v2397
    %v2606 = vunpack.c.l.b16 %v2398
    %v2607 = vunpack.c.h.b16 %v2398
    %v2608 = vunpack.c.l.b16 %v2399
    %v2609 = vunpack.c.h.b16 %v2399
    %v2610 = vunpack.c.l.b16 %v2400
    %v2611 = vunpack.c.h.b16 %v2400
    %v2612 = vunpack.c.l.b16 %v2401
    %v2613 = vunpack.c.h.b16 %v2401
    %v2614 = vunpack.c.l.b16 %v2402
    %v2615 = vunpack.c.h.b16 %v2402
    %v2616 = vunpack.c.l.b16 %v2403
    %v2617 = vunpack.c.h.b16 %v2403
    %v2618 = vunpack.c.l.b16 %v2404
    %v2619 = vunpack.c.h.b16 %v2404
    %v2620 = vunpack.c.l.b16 %v2405
    %v2621 = vunpack.c.h.b16 %v2405
    %v2622 = vunpack.c.l.b16 %v2406
    %v2623 = vunpack.c.h.b16 %v2406
    %v2624 = vunpack.c.l.b16 %v2407
    %v2625 = vunpack.c.h.b16 %v2407
    %v2626 = vunpack.c.l.b16 %v2408
    %v2627 = vunpack.c.h.b16 %v2408
    %v2628 = vunpack.c.l.b16 %v2409
    %v2629 = vunpack.c.h.b16 %v2409
    %v2630 = vunpack.c.l.b16 %v2410
    %v2631 = vunpack.c.h.b16 %v2410
    %v2632 = vunpack.c.l.b16 %v2411
    %v2633 = vunpack.c.h.b16 %v2411
    %v2634 = vunpack.c.l.b16 %v2412
    %v2635 = vunpack.c.h.b16 %v2412
    %v2636 = vunpack.c.l.b16 %v2413
    %v2637 = vunpack.c.h.b16 %v2413
    %v2638 = vunpack.c.l.b16 %v2414
    %v2639 = vunpack.c.h.b16 %v2414
    %v2640 = vunpack.c.l.b16 %v2415
    %v2641 = vunpack.c.h.b16 %v2415
    %v2642 = vunpack.c.l.b16 %v2416
    %v2643 = vunpack.c.h.b16 %v2416
    %v2644 = vunpack.c.l.b16 %v2417
    %v2645 = vunpack.c.h.b16 %v2417
    %v2646 = vunpack.c.l.b16 %v2418
    %v2647 = vunpack.c.h.b16 %v2418
    %v2648 = vunpack.c.l.b16 %v2419
    %v2649 = vunpack.c.h.b16 %v2419
    %v2650 = vunpack.c.l.b16 %v2420
    %v2651 = vunpack.c.h.b16 %v2420
    %v2652 = vunpack.c.l.b16 %v2421
    %v2653 = vunpack.c.h.b16 %v2421
    %v2654 = vunpack.c.l.b16 %v2422
    %v2655 = vunpack.c.h.b16 %v2422
    %v2656 = vunpack.c.l.b16 %v2423
    %v2657 = vunpack.c.h.b16 %v2423
    %v2658 = vunpack.c.l.b16 %v2424
    %v2659 = vunpack.c.h.b16 %v2424
    %v2660 = vunpack.c.l.b16 %v2425
    %v2661 = vunpack.c.h.b16 %v2425
    %v2662 = vunpack.c.l.b16 %v2426
    %v2663 = vunpack.c.h.b16 %v2426
    %v2664 = vunpack.c.l.b16 %v2427
    %v2665 = vunpack.c.h.b16 %v2427
    %v2666 = vunpack.c.l.b16 %v2428
    %v2667 = vunpack.c.h.b16 %v2428
    %v2668 = vunpack.c.l.b16 %v2429
    %v2669 = vunpack.c.h.b16 %v2429
    %v2670 = vunpack.c.l.b16 %v2430
    %v2671 = vunpack.c.h.b16 %v2430
    %v2672 = vunpack.c.l.b16 %v2431
    %v2673 = vunpack.c.h.b16 %v2431
    %v2674 = vunpack.c.l.b16 %v2432
    %v2675 = vunpack.c.h.b16 %v2432
    %v2676 = vunpack.c.l.b16 %v2433
    %v2677 = vunpack.c.h.b16 %v2433
    %v2678 = vunpack.c.l.b16 %v2434
    %v2679 = vunpack.c.h.b16 %v2434
    %v2680 = vunpack.c.l.b16 %v2435
    %v2681 = vunpack.c.h.b16 %v2435
    %v2682 = vunpack.c.l.b16 %v2436
    %v2683 = vunpack.c.h.b16 %v2436
    %v2684 = vunpack.c.l.b16 %v2437
    %v2685 = vunpack.c.h.b16 %v2437
    %v2686 = vunpack.c.l.b16 %v2438
    %v2687 = vunpack.c.h.b16 %v2438
    %v2688 = vunpack.c.l.b16 %v2439
    %v2689 = vunpack.c.h.b16 %v2439
    %v2690 = vunpack.c.l.b16 %v2440
    %v2691 = vunpack.c.h.b16 %v2440
    %v2692 = vunpack.c.l.b16 %v2441
    %v2693 = vunpack.c.h.b16 %v2441
    %v2694 = vunpack.c.l.b16 %v2442
    %v2695 = vunpack.c.h.b16 %v2442
    %v2696 = vunpack.c.l.b16 %v2443
    %v2697 = vunpack.c.h.b16 %v2443
    %v2698 = vunpack.c.l.b16 %v2444
    %v2699 = vunpack.c.h.b16 %v2444
    %v2700 = vunpack.c.l.b16 %v2445
    %v2701 = vunpack.c.h.b16 %v2445
    %v2702 = vunpack.c.l.b16 %v2446
    %v2703 = vunpack.c.h.b16 %v2446
    %v2704 = vunpack.c.l.b16 %v2447
    %v2705 = vunpack.c.h.b16 %v2447
    %v2706 = vunpack.c.l.b16 %v2448
    %v2707 = vunpack.c.h.b16 %v2448
    %v2708 = vunpack.c.l.b16 %v2449
    %v2709 = vunpack.c.h.b16 %v2449
    %v2710 = vunpack.c.l.b16 %v2450
    %v2711 = vunpack.c.h.b16 %v2450
    %v2712 = vunpack.c.l.b16 %v2451
    %v2713 = vunpack.c.h.b16 %v2451
    %v2714 = vunpack.c.l.b16 %v2452
    %v2715 = vunpack.c.h.b16 %v2452
    %v2716 = vunpack.c.l.b16 %v2453
    %v2717 = vunpack.c.h.b16 %v2453
    %v2718 = vunpack.c.l.b16 %v2454
    %v2719 = vunpack.c.h.b16 %v2454
    %v2720 = vunpack.c.l.b16 %v2455
    %v2721 = vunpack.c.h.b16 %v2455
    %v2722 = vunpack.c.l.b16 %v2456
    %v2723 = vunpack.c.h.b16 %v2456
    %v2724 = vunpack.c.l.b16 %v2457
    %v2725 = vunpack.c.h.b16 %v2457
    %v2726 = vunpack.c.l.b16 %v2458
    %v2727 = vunpack.c.h.b16 %v2458
    %v2728 = vunpack.c.l.b16 %v2459
    %v2729 = vunpack.c.h.b16 %v2459
    %v2730 = vunpack.c.l.b16 %v2460
    %v2731 = vunpack.c.h.b16 %v2460
    %v2732 = vunpack.c.l.b16 %v2461
    %v2733 = vunpack.c.h.b16 %v2461
    %v2734 = vunpack.c.l.b16 %v2462
    %v2735 = vunpack.c.h.b16 %v2462
    %v2736 = vunpack.c.l.b16 %v2463
    %v2737 = vunpack.c.h.b16 %v2463
    %v2738 = vunpack.c.l.b16 %v2464
    %v2739 = vunpack.c.h.b16 %v2464
    %v2740 = vunpack.c.l.b16 %v2465
    %v2741 = vunpack.c.h.b16 %v2465
    %v2742 = vunpack.c.l.b16 %v2466
    %v2743 = vunpack.c.h.b16 %v2466
    %v2744 = vunpack.c.l.b16 %v2467
    %v2745 = vunpack.c.h.b16 %v2467
    %v2746 = vunpack.c.l.b16 %v2468
    %v2747 = vunpack.c.h.b16 %v2468
    %v2748 = vunpack.c.l.b16 %v2469
    %v2749 = vunpack.c.h.b16 %v2469
    %v2750 = vunpack.c.l.b16 %v2470
    %v2751 = vunpack.c.h.b16 %v2470
    %v2752 = vunpack.c.l.b16 %v2471
    %v2753 = vunpack.c.h.b16 %v2471
    %v2754 = vunpack.c.l.b16 %v2472
    %v2755 = vunpack.c.h.b16 %v2472
    %v2756 = vunpack.c.l.b16 %v2473
    %v2757 = vunpack.c.h.b16 %v2473
    %v2758 = vunpack.c.l.b16 %v2474
    %v2759 = vunpack.c.h.b16 %v2474
    %v2760 = vunpack.c.l.b16 %v2475
    %v2761 = vunpack.c.h.b16 %v2475
    %v2762 = vunpack.c.l.b16 %v2476
    %v2763 = vunpack.c.h.b16 %v2476
    %v2764 = vunpack.c.l.b16 %v2477
    %v2765 = vunpack.c.h.b16 %v2477
    %v2766 = vpack.c.b16 %v2576, %v2574
    %v2767 = vpack.c.b16 %v2577, %v2575
    %v2768 = vpack.c.b16 %v2580, %v2578
    %v2769 = vpack.c.b16 %v2581, %v2579
    %v2770 = vpack.c.b16 %v2584, %v2582
    %v2771 = vpack.c.b16 %v2585, %v2583
    %v2772 = vpack.c.b16 %v2588, %v2586
    %v2773 = vpack.c.b16 %v2589, %v2587
    %v2774 = vpack.c.b16 %v2592, %v2590
    %v2775 = vpack.c.b16 %v2593, %v2591
    %v2776 = vpack.c.b16 %v2596, %v2594
    %v2777 = vpack.c.b16 %v2597, %v2595
    %v2778 = vpack.c.b16 %v2600, %v2598
    %v2779 = vpack.c.b16 %v2601, %v2599
    %v2780 = vpack.c.b16 %v2604, %v2602
    %v2781 = vpack.c.b16 %v2605, %v2603
    %v2782 = vpack.c.b16 %v2608, %v2606
    %v2783 = vpack.c.b16 %v2609, %v2607
    %v2784 = vpack.c.b16 %v2612, %v2610
    %v2785 = vpack.c.b16 %v2613, %v2611
    %v2786 = vpack.c.b16 %v2616, %v2614
    %v2787 = vpack.c.b16 %v2617, %v2615
    %v2788 = vpack.c.b16 %v2620, %v2618
    %v2789 = vpack.c.b16 %v2621, %v2619
    %v2790 = vpack.c.b16 %v2624, %v2622
    %v2791 = vpack.c.b16 %v2625, %v2623
    %v2792 = vpack.c.b16 %v2628, %v2626
    %v2793 = vpack.c.b16 %v2629, %v2627
    %v2794 = vpack.c.b16 %v2632, %v2630
    %v2795 = vpack.c.b16 %v2633, %v2631
    %v2796 = vpack.c.b16 %v2636, %v2634
    %v2797 = vpack.c.b16 %v2637, %v2635
    %v2798 = vpack.c.b16 %v2640, %v2638
    %v2799 = vpack.c.b16 %v2641, %v2639
    %v2800 = vpack.c.b16 %v2644, %v2642
    %v2801 = vpack.c.b16 %v2645, %v2643
    %v2802 = vpack.c.b16 %v2648, %v2646
    %v2803 = vpack.c.b16 %v2649, %v2647
    %v2804 = vpack.c.b16 %v2652, %v2650
    %v2805 = vpack.c.b16 %v2653, %v2651
    %v2806 = vpack.c.b16 %v2656, %v2654
    %v2807 = vpack.c.b16 %v2657, %v2655
    %v2808 = vpack.c.b16 %v2660, %v2658
    %v2809 = vpack.c.b16 %v2661, %v2659
    %v2810 = vpack.c.b16 %v2664, %v2662
    %v2811 = vpack.c.b16 %v2665, %v2663
    %v2812 = vpack.c.b16 %v2668, %v2666
    %v2813 = vpack.c.b16 %v2669, %v2667
    %v2814 = vpack.c.b16 %v2672, %v2670
    %v2815 = vpack.c.b16 %v2673, %v2671
    %v2816 = vpack.c.b16 %v2676, %v2674
    %v2817 = vpack.c.b16 %v2677, %v2675
    %v2818 = vpack.c.b16 %v2680, %v2678
    %v2819 = vpack.c.b16 %v2681, %v2679
    %v2820 = vpack.c.b16 %v2684, %v2682
    %v2821 = vpack.c.b16 %v2685, %v2683
    %v2822 = vpack.c.b16 %v2688, %v2686
    %v2823 = vpack.c.b16 %v2689, %v2687
    %v2824 = vpack.c.b16 %v2692, %v2690
    %v2825 = vpack.c.b16 %v2693, %v2691
    %v2826 = vpack.c.b16 %v2696, %v2694
    %v2827 = vpack.c.b16 %v2697, %v2695
    %v2828 = vpack.c.b16 %v2700, %v2698
    %v2829 = vpack.c.b16 %v2701, %v2699
    %v2830 = vpack.c.b16 %v2704, %v2702
    %v2831 = vpack.c.b16 %v2705, %v2703
    %v2832 = vpack.c.b16 %v2708, %v2706
    %v2833 = vpack.c.b16 %v2709, %v2707
    %v2834 = vpack.c.b16 %v2712, %v2710
    %v2835 = vpack.c.b16 %v2713, %v2711
    %v2836 = vpack.c.b16 %v2716, %v2714
    %v2837 = vpack.c.b16 %v2717, %v2715
    %v2838 = vpack.c.b16 %v2720, %v2718
    %v2839 = vpack.c.b16 %v2721, %v2719
    %v2840 = vpack.c.b16 %v2724, %v2722
    %v2841 = vpack.c.b16 %v2725, %v2723
    %v2842 = vpack.c.b16 %v2728, %v2726
    %v2843 = vpack.c.b16 %v2729, %v2727
    %v2844 = vpack.c.b16 %v2732, %v2730
    %v2845 = vpack.c.b16 %v2733, %v2731
    %v2846 = vpack.c.b16 %v2736, %v2734
    %v2847 = vpack.c.b16 %v2737, %v2735
    %v2848 = vpack.c.b16 %v2740, %v2738
    %v2849 = vpack.c.b16 %v2741, %v2739
    %v2850 = vpack.c.b16 %v2744, %v2742
    %v2851 = vpack.c.b16 %v2745, %v2743
    %v2852 = vpack.c.b16 %v2748, %v2746
    %v2853 = vpack.c.b16 %v2749, %v2747
    %v2854 = vpack.c.b16 %v2752, %v2750
    %v2855 = vpack.c.b16 %v2753, %v2751
    %v2856 = vpack.c.b16 %v2756, %v2754
    %v2857 = vpack.c.b16 %v2757, %v2755
    %v2858 = vpack.c.b16 %v2760, %v2758
    %v2859 = vpack.c.b16 %v2761, %v2759
    %v2860 = vpack.c.b16 %v2764, %v2762
    %v2861 = vpack.c.b16 %v2765, %v2763
    %2958 = vmatprep.subr.bf16.mxu0 %v2781
    %2959 = vmatpush1.bf16.msra.mxu0 %v2780
    %2960 = vmatprep.subr.bf16.mxu0 %v2779
    %2961 = vmatpush1.bf16.msra.mxu0 %v2778
    %2962 = vmatprep.subr.bf16.mxu0 %v2777
    %2963 = vmatpush1.bf16.msra.mxu0 %v2776
    %2964 = vmatprep.subr.bf16.mxu0 %v2775
    %2965 = vmatpush1.bf16.msra.mxu0 %v2774
    %2966 = vmatprep.subr.bf16.mxu0 %v2773
    %2967 = vmatpush1.bf16.msra.mxu0 %v2772
    %2968 = vmatprep.subr.bf16.mxu0 %v2771
    %2969 = vmatpush1.bf16.msra.mxu0 %v2770
    %2970 = vmatprep.subr.bf16.mxu0 %v2769
    %2971 = vmatpush1.bf16.msra.mxu0 %v2768
    %2972 = vmatprep.subr.bf16.mxu0 %v2767
    %2973 = vmatpush1.bf16.msra.mxu0 %v2766
    %2974 = vmatprep.subr.bf16.mxu0 %v2797
    %2975 = vmatpush2.bf16.msra.mxu0 %v2796
    %2976 = vmatprep.subr.bf16.mxu0 %v2795
    %2977 = vmatpush2.bf16.msra.mxu0 %v2794
    %2978 = vmatprep.subr.bf16.mxu0 %v2793
    %2979 = vmatpush2.bf16.msra.mxu0 %v2792
    %2980 = vmatprep.subr.bf16.mxu0 %v2791
    %2981 = vmatpush2.bf16.msra.mxu0 %v2790
    %2982 = vmatprep.subr.bf16.mxu0 %v2789
    %2983 = vmatpush2.bf16.msra.mxu0 %v2788
    %2984 = vmatprep.subr.bf16.mxu0 %v2787
    %2985 = vmatpush2.bf16.msra.mxu0 %v2786
    %2986 = vmatprep.subr.bf16.mxu0 %v2785
    %2987 = vmatpush2.bf16.msra.mxu0 %v2784
    %2988 = vmatprep.subr.bf16.mxu0 %v2783
    %2989 = vmatpush2.bf16.msra.mxu0 %v2782
    %2990 = vmatprep.mubr.bf16.mxu0 %v96
    %2991 = vmatmul.mubr.bf16.gmra.mxu0 %v95
    %v2992 = vpop.f32.mrf.mxu0
    %v2993 = vadd.f32 0.0, %v2992
    %v2994 = vpop.f32.mrf.mxu0
    %v2995 = vadd.f32 0.0, %v2994
    %v2996 = vpop.f32.mrf.mxu0
    %v2997 = vadd.f32 0.0, %v2996
    %v2998 = vpop.f32.mrf.mxu0
    %v2999 = vadd.f32 0.0, %v2998
    %3000 = vmatprep.mubr.bf16.mxu0 %v102
    %3001 = vmatmul.mubr.bf16.gmra.mxu0 %v101
    %v3002 = vpop.f32.mrf.mxu0
    %v3003 = vadd.f32 0.0, %v3002
    %v3004 = vpop.f32.mrf.mxu0
    %v3005 = vadd.f32 0.0, %v3004
    %v3006 = vpop.f32.mrf.mxu0
    %v3007 = vadd.f32 0.0, %v3006
    %v3008 = vpop.f32.mrf.mxu0
    %v3009 = vadd.f32 0.0, %v3008
    %3010 = vdwg.mxu0
    %3011 = vmatprep.subr.bf16.mxu0 %v2813
    %3012 = vmatpush1.bf16.msra.mxu0 %v2812
    %3013 = vmatprep.subr.bf16.mxu0 %v2811
    %3014 = vmatpush1.bf16.msra.mxu0 %v2810
    %3015 = vmatprep.subr.bf16.mxu0 %v2809
    %3016 = vmatpush1.bf16.msra.mxu0 %v2808
    %3017 = vmatprep.subr.bf16.mxu0 %v2807
    %3018 = vmatpush1.bf16.msra.mxu0 %v2806
    %3019 = vmatprep.subr.bf16.mxu0 %v2805
    %3020 = vmatpush1.bf16.msra.mxu0 %v2804
    %3021 = vmatprep.subr.bf16.mxu0 %v2803
    %3022 = vmatpush1.bf16.msra.mxu0 %v2802
    %3023 = vmatprep.subr.bf16.mxu0 %v2801
    %3024 = vmatpush1.bf16.msra.mxu0 %v2800
    %3025 = vmatprep.subr.bf16.mxu0 %v2799
    %3026 = vmatpush1.bf16.msra.mxu0 %v2798
    %3027 = vmatprep.subr.bf16.mxu0 %v2829
    %3028 = vmatpush2.bf16.msra.mxu0 %v2828
    %3029 = vmatprep.subr.bf16.mxu0 %v2827
    %3030 = vmatpush2.bf16.msra.mxu0 %v2826
    %3031 = vmatprep.subr.bf16.mxu0 %v2825
    %3032 = vmatpush2.bf16.msra.mxu0 %v2824
    %3033 = vmatprep.subr.bf16.mxu0 %v2823
    %3034 = vmatpush2.bf16.msra.mxu0 %v2822
    %3035 = vmatprep.subr.bf16.mxu0 %v2821
    %3036 = vmatpush2.bf16.msra.mxu0 %v2820
    %3037 = vmatprep.subr.bf16.mxu0 %v2819
    %3038 = vmatpush2.bf16.msra.mxu0 %v2818
    %3039 = vmatprep.subr.bf16.mxu0 %v2817
    %3040 = vmatpush2.bf16.msra.mxu0 %v2816
    %3041 = vmatprep.subr.bf16.mxu0 %v2815
    %3042 = vmatpush2.bf16.msra.mxu0 %v2814
    %3043 = vmatprep.mubr.bf16.mxu0 %v98
    %3044 = vmatmul.mubr.bf16.gmra.mxu0 %v97
    %v3045 = vpop.f32.mrf.mxu0
    %v3046 = vadd.f32 %v2993, %v3045
    %v3047 = vpop.f32.mrf.mxu0
    %v3048 = vadd.f32 %v2995, %v3047
    %v3049 = vpop.f32.mrf.mxu0
    %v3050 = vadd.f32 %v2997, %v3049
    %v3051 = vpop.f32.mrf.mxu0
    %v3052 = vadd.f32 %v2999, %v3051
    %3053 = vmatprep.mubr.bf16.mxu0 %v104
    %3054 = vmatmul.mubr.bf16.gmra.mxu0 %v103
    %v3055 = vpop.f32.mrf.mxu0
    %v3056 = vadd.f32 %v3003, %v3055
    %v3057 = vpop.f32.mrf.mxu0
    %v3058 = vadd.f32 %v3005, %v3057
    %v3059 = vpop.f32.mrf.mxu0
    %v3060 = vadd.f32 %v3007, %v3059
    %v3061 = vpop.f32.mrf.mxu0
    %v3062 = vadd.f32 %v3009, %v3061
    %3063 = vdwg.mxu0
    %3064 = vmatprep.subr.bf16.mxu0 %v2845
    %3065 = vmatpush1.bf16.msra.mxu0 %v2844
    %3066 = vmatprep.subr.bf16.mxu0 %v2843
    %3067 = vmatpush1.bf16.msra.mxu0 %v2842
    %3068 = vmatprep.subr.bf16.mxu0 %v2841
    %3069 = vmatpush1.bf16.msra.mxu0 %v2840
    %3070 = vmatprep.subr.bf16.mxu0 %v2839
    %3071 = vmatpush1.bf16.msra.mxu0 %v2838
    %3072 = vmatprep.subr.bf16.mxu0 %v2837
    %3073 = vmatpush1.bf16.msra.mxu0 %v2836
    %3074 = vmatprep.subr.bf16.mxu0 %v2835
    %3075 = vmatpush1.bf16.msra.mxu0 %v2834
    %3076 = vmatprep.subr.bf16.mxu0 %v2833
    %3077 = vmatpush1.bf16.msra.mxu0 %v2832
    %3078 = vmatprep.subr.bf16.mxu0 %v2831
    %3079 = vmatpush1.bf16.msra.mxu0 %v2830
    %3080 = vmatprep.subr.bf16.mxu0 %v2861
    %3081 = vmatpush2.bf16.msra.mxu0 %v2860
    %3082 = vmatprep.subr.bf16.mxu0 %v2859
    %3083 = vmatpush2.bf16.msra.mxu0 %v2858
    %3084 = vmatprep.subr.bf16.mxu0 %v2857
    %3085 = vmatpush2.bf16.msra.mxu0 %v2856
    %3086 = vmatprep.subr.bf16.mxu0 %v2855
    %3087 = vmatpush2.bf16.msra.mxu0 %v2854
    %3088 = vmatprep.subr.bf16.mxu0 %v2853
    %3089 = vmatpush2.bf16.msra.mxu0 %v2852
    %3090 = vmatprep.subr.bf16.mxu0 %v2851
    %3091 = vmatpush2.bf16.msra.mxu0 %v2850
    %3092 = vmatprep.subr.bf16.mxu0 %v2849
    %3093 = vmatpush2.bf16.msra.mxu0 %v2848
    %3094 = vmatprep.subr.bf16.mxu0 %v2847
    %3095 = vmatpush2.bf16.msra.mxu0 %v2846
    %3096 = vmatprep.mubr.bf16.mxu0 %v100
    %3097 = vmatmul.mubr.bf16.gmra.mxu0 %v99
    %v3098 = vpop.f32.mrf.mxu0
    %v3099 = vadd.f32 %v3046, %v3098
    %v3100 = vpop.f32.mrf.mxu0
    %v3101 = vadd.f32 %v3048, %v3100
    %v3102 = vpop.f32.mrf.mxu0
    %v3103 = vadd.f32 %v3050, %v3102
    %v3104 = vpop.f32.mrf.mxu0
    %v3105 = vadd.f32 %v3052, %v3104
    %3106 = vmatprep.mubr.bf16.mxu0 %v106
    %3107 = vmatmul.mubr.bf16.gmra.mxu0 %v105
    %v3108 = vpop.f32.mrf.mxu0
    %v3109 = vadd.f32 %v3056, %v3108
    %v3110 = vpop.f32.mrf.mxu0
    %v3111 = vadd.f32 %v3058, %v3110
    %v3112 = vpop.f32.mrf.mxu0
    %v3113 = vadd.f32 %v3060, %v3112
    %v3114 = vpop.f32.mrf.mxu0
    %v3115 = vadd.f32 %v3062, %v3114
    %3116 = vdwg.mxu0
    %v3117 = vrot.slane %v3099, 6
    %v3118 = vrot.slane %v3103, 6
    %v3119 = vrot.slane %v3109, 6
    %v3120 = vrot.slane %v3113, 6
    %vm3121 = vcmp.lt.s32.totalorder %v847, 2
    %v3122 = vsel %vm3121, %v3119, %v3120
    %v3123 = vsel %vm3121, %v3118, %v3119
    %v3124 = vsel %vm3121, %v3117, %v3118
    %v3125 = vsel %vm3121, %v3120, %v3117
    %v3126 = vrot.slane %v3101, 7
    %v3127 = vrot.slane %v3105, 7
    %v3128 = vrot.slane %v3111, 7
    %v3129 = vrot.slane %v3115, 7
    %vm3130 = vcmp.lt.s32.totalorder %v847, 1
    %v3131 = vsel %vm3130, %v3128, %v3129
    %v3132 = vsel %vm3130, %v3127, %v3128
    %v3133 = vsel %vm3130, %v3126, %v3127
    %v3134 = vsel %vm3130, %v3129, %v3126
    %v3135 = vadd.f32 %v3124, %v3133
    %v3136 = vadd.f32 %v3123, %v3132
    %v3137 = vadd.f32 %v3122, %v3131
    %v3138 = vadd.f32 %v3125, %v3134
    %v3139 = vadd.f32 %v2377, %v3135
    %v3140 = vadd.f32 %v2378, %v3136
    %v3141 = vadd.f32 %v2379, %v3137
    %v3142 = vadd.f32 %v2380, %v3138
    %v3143 = vld [vmem:[#allocation7] sm:$0x1]
    %v3145 = vlaneseq
    %v3146 = vshrl.u32 %v3145, 7
    %v3147 = vsub.s32 0, %v3146
    %v3148 = vrot.slane %v3143, %v3147
    %v3150 = vadd.f32 %v3139, %v3148
    %v3151 = vadd.f32 %v3140, %v3148
    %v3152 = vadd.f32 %v3141, %v3148
    %v3153 = vadd.f32 %v3142, %v3148
    %v3154 = vmax.f32 %v3150, 0.0
    %v3155 = vmax.f32 %v3151, 0.0
    %v3156 = vmax.f32 %v3152, 0.0
    %v3157 = vmax.f32 %v3153, 0.0
    %v3158 = vld [vmem:[#allocation8] sm:$0xff]
    %v3159 = vld [vmem:[#allocation8 + $0x8] sm:$0xff]
    %vm3160 = vcmp.gt.f32.partialorder %v3158, 0.5
    %vm3161 = vcmp.gt.f32.partialorder %v3159, 0.5
    %v3162 = vsel %vm3160, 1, 0
    %v3163 = vsel %vm3161, 1, 0
    %vm3164 = vcmp.eq.s32.totalorder %v3162, 1
    %vm3165 = vcmp.eq.s32.totalorder %v3163, 1
    %v3166 = vsel %vm3164, %v3154, 0.0
    %v3167 = vsel %vm3165, %v3155, 0.0
    %v3168 = vsel %vm3164, %v3156, 0.0
    %v3169 = vsel %vm3165, %v3157, 0.0
    %v3170 = vmax.f32 %v3166, %v3167
    %v3171 = vrot.slane %v3170, 4
    %v3172 = vmax.f32 %v3170, %v3171
    %v3173 = vrot.slane %v3172, 2
    %v3174 = vmax.f32 %v3172, %v3173
    %v3175 = vrot.slane %v3174, 1
    %v3176 = vmax.f32 %v3174, %v3175
    %v3177 = vmax.f32 %v3168, %v3169
    %v3178 = vrot.slane %v3177, 4
    %v3179 = vmax.f32 %v3177, %v3178
    %v3180 = vrot.slane %v3179, 2
    %v3181 = vmax.f32 %v3179, %v3180
    %v3182 = vrot.slane %v3181, 1
    %v3183 = vmax.f32 %v3181, %v3182
    %vm3186 = vcmask 1041409
    %v3187 = vsel %vm3186, %v3183, %v3176
    %3189 = vst [vmem:[#allocation10] sm:$0x3] %v3187
    // Predicated region
    $region34: #{tpu_custom_call.1} parent=1 // pred_check
      _
    $region35: #{tpu_custom_call.1} parent=1 // pred_check_branch
      %3191 = sbr.rel (0) target = $region37
    $region36: #{tpu_custom_call.1} parent=1 // pred_region
      %s3193 = ssub.s32 32, 32
      %3194 = vsyncadd [#allocation4], %s3193
      %s3196 = sshll.u32 [#allocation10], 4
      %s3197 = int_to_ptr.vmem [resolvable:$true] %s3196
      %3199 = dma.vmem_to_hbm [thread:$0]  %s3197, 32, %s4, [#allocation4]
    $region37: #{tpu_custom_call.1} parent=1 // pred_fallthru
      _
    // Predicated region
    $region38: #{tpu_custom_call.1} parent=1 // pred_check
      _
    $region39: #{tpu_custom_call.1} parent=1 // pred_check_branch
      %3201 = sbr.rel (0) target = $region41
    $region40: #{tpu_custom_call.1} parent=1 // pred_region
      %3202 = dma.done [#allocation4], 32
    $region41: #{tpu_custom_call.1} parent=1 // pred_fallthru
      _
    %3203 = vsyncpa [#allocation3], 1
    %3204 = vsyncpa [#allocation6], 1
    %3205 = vsyncpa [#allocation9], 1
    %3206 = vsyncpa [#allocation4], 1

</llo_original>
